<compile_context>
chip_gen: v7x
topology: tpu7x:2x2x1
jax: 0.10.0
libtpu: 0.0.40
codegen_flags: <defaults>
</compile_context>

<pallas_src>
import functools

import jax
import jax.numpy as jnp
import numpy as np
from jax.experimental import pallas as pl
from jax.experimental.pallas import tpu as pltpu

BN_EPS = 1e-5


# ------------------------------- Pallas kernel ------------------------------ #
def _conv_block_kernel(x_ref, s1_ref, b1_ref, w1_ref, b2_ref, w2_ref, o_ref,
                       *, H, W):
  """Fused BN->ReLU->1x1conv->BN->ReLU->3x3conv for ONE image.

  x_ref : (1, M, Cin)  f32   image rows flattened as m = h*W + w
  s1/b1 : (1, Cin)     f32   folded BN1 scale / shift
  w1    : (Cin, F)     bf16  1x1 conv weight with BN2 scale pre-folded
  b2    : (1, F)       f32   folded BN2 shift
  w2    : (3, F, 3*G)  bf16  3x3 conv weight; leading axis = kx (dx+1),
                             columns grouped by ky: col = ky*G + g
  o_ref : (1, M, G)    f32   output
  """
  M = H * W
  F = w1_ref.shape[1]
  G = o_ref.shape[2]

  # BN1 (eval, folded) + ReLU in f32 on the VPU.
  x = jnp.maximum(x_ref[0] * s1_ref[...] + b1_ref[...], 0.0)

  # 1x1 conv (BN2 scale already folded into w1) + BN2 shift + ReLU.
  # MXU gets bf16 operands with f32 accumulation.
  t = jnp.dot(x.astype(jnp.bfloat16), w1_ref[...],
              preferred_element_type=jnp.float32)
  t = jnp.maximum(t + b2_ref[...], 0.0)

  # ---- 3x3 conv: dx (width) taps folded into the contraction. -------------
  # t_left[m] = t[m-1] (pixel to the left), t_right[m] = t[m+1]; pixels that
  # fall outside the row (w == 0 / w == W-1) are zeroed.  The +-1 sublane
  # rolls and masks act on the lane-dense (M, F) value, so no misaligned
  # VMEM windows are involved.
  m_ids = jax.lax.broadcasted_iota(jnp.int32, (M, F), 0)
  if (W & (W - 1)) == 0:                     # static: W is a power of two
    w_ids = jnp.bitwise_and(m_ids, W - 1)
  else:
    w_ids = m_ids % W
  t_mid = t.astype(jnp.bfloat16)
  t_left = jnp.where(w_ids == 0, 0.0,
                     pltpu.roll(t, shift=1, axis=0)).astype(jnp.bfloat16)
  t_right = jnp.where(w_ids == W - 1, 0.0,
                      pltpu.roll(t, shift=M - 1, axis=0)).astype(jnp.bfloat16)

  # One matmul per dx tap; RHS columns grouped by dy (ky): (M, F) @ (F, 3G).
  u = (jnp.dot(t_left, w2_ref[0], preferred_element_type=jnp.float32)
       + jnp.dot(t_mid, w2_ref[1], preferred_element_type=jnp.float32)
       + jnp.dot(t_right, w2_ref[2], preferred_element_type=jnp.float32))

  # ---- dy (height) taps: pure +-W row shifts (W and M-W are multiples of 8,
  # so the concatenates are sublane-aligned; no masks / padded scratch). ----
  u_top = u[:, 0:G]            # contribution of row h-1  (ky = 0)
  u_mid = u[:, G:2 * G]        # ky = 1
  u_bot = u[:, 2 * G:3 * G]    # ky = 2
  zrows = jnp.zeros((W, G), jnp.float32)
  top = jnp.concatenate([zrows, u_top[:M - W, :]], axis=0)   # u_top[m - W]
  bot = jnp.concatenate([u_bot[W:, :], zrows], axis=0)       # u_bot[m + W]
  o_ref[0] = (u_mid + top + bot).astype(o_ref.dtype)


def conv_block_pallas(x_nhwc, params):
  """One conv_block on an NHWC input.  Returns (N, H, W, G) f32.

  This is the entry point a dense block should use (stay NHWC across layers
  so the NCHW<->NHWC transposes are paid only at the block boundary).
  """
  s1, b1, w1, s2, b2, w2 = params        # w1: (Cin, F), w2: (3, 3, F, G) HWIO
  N, H, W, Cin = x_nhwc.shape
  F = w1.shape[1]
  G = w2.shape[-1]
  M = H * W

  # Fold BN2's scale into the 1x1 weight (exact: a per-output-channel scale
  # commutes with the matmul).  BN1 cannot be folded (ReLU sits in between).
  w1f = (w1 * s2[None, :]).astype(jnp.bfloat16)
  # Pack the 3x3 weight as (kx, F, ky*G + g).
  w2p = jnp.transpose(w2, (1, 2, 0, 3)).reshape(3, F, 3 * G).astype(jnp.bfloat16)

  x2d = x_nhwc.reshape(N, M, Cin).astype(jnp.float32)

  kernel = functools.partial(_conv_block_kernel, H=H, W=W)
  flops = 2 * N * M * Cin * F + 2 * N * M * (3 * F) * (3 * G)
  bytes_accessed = (N * M * Cin * 4 + N * M * G * 4 + Cin * F * 2
                    + 3 * F * 3 * G * 2 + (2 * Cin + F) * 4)

  out = pl.pallas_call(
      kernel,
      out_shape=jax.ShapeDtypeStruct((N, M, G), jnp.float32),
      grid=(N,),
      in_specs=[
          pl.BlockSpec((1, M, Cin), lambda n: (n, 0, 0)),
          pl.BlockSpec((1, Cin), lambda n: (0, 0)),
          pl.BlockSpec((1, Cin), lambda n: (0, 0)),
          pl.BlockSpec((Cin, F), lambda n: (0, 0)),
          pl.BlockSpec((1, F), lambda n: (0, 0)),
          pl.BlockSpec((3, F, 3 * G), lambda n: (0, 0, 0)),
      ],
      out_specs=pl.BlockSpec((1, M, G), lambda n: (n, 0, 0)),
      compiler_params=pltpu.CompilerParams(
          dimension_semantics=("parallel",)),
      cost_estimate=pl.CostEstimate(flops=flops, transcendentals=0,
                                    bytes_accessed=bytes_accessed),
  )(x2d,
    s1.reshape(1, Cin).astype(jnp.float32),
    b1.reshape(1, Cin).astype(jnp.float32),
    w1f,
    b2.reshape(1, F).astype(jnp.float32),
    w2p)
  return out.reshape(N, H, W, G)


@jax.jit
def conv_block_forward(x_nchw, params):
  """Matches conv_block.forward (PyTorch): NCHW in, NCHW out."""
  x = jnp.transpose(x_nchw, (0, 2, 3, 1))       # NCHW -> NHWC
  y = conv_block_pallas(x, params)
  return jnp.transpose(y, (0, 3, 1, 2))         # NHWC -> NCHW


# ----------------------------- parameter creation --------------------------- #
def init_conv_block_params(key, in_channels, out_channels, nb_filter):
  """Eval-mode BatchNorm (folded to scale/shift) + conv weights, all f32."""
  f = nb_filter * 4
  ks = jax.random.split(key, 10)
  gamma1 = jax.random.uniform(ks[0], (in_channels,), minval=0.5, maxval=1.5)
  beta1 = 0.1 * jax.random.normal(ks[1], (in_channels,))
  mean1 = 0.1 * jax.random.normal(ks[2], (in_channels,))
  var1 = jax.random.uniform(ks[3], (in_channels,), minval=0.5, maxval=1.5)
  w1 = jax.random.normal(ks[4], (in_channels, f)) / jnp.sqrt(in_channels)
  gamma2 = jax.random.uniform(ks[5], (f,), minval=0.5, maxval=1.5)
  beta2 = 0.1 * jax.random.normal(ks[6], (f,))
  mean2 = 0.1 * jax.random.normal(ks[7], (f,))
  var2 = jax.random.uniform(ks[8], (f,), minval=0.5, maxval=1.5)
  w2 = jax.random.normal(ks[9], (3, 3, f, out_channels)) / jnp.sqrt(9 * f)

  s1 = gamma1 / jnp.sqrt(var1 + BN_EPS)
  b1 = beta1 - mean1 * s1
  s2 = gamma2 / jnp.sqrt(var2 + BN_EPS)
  b2 = beta2 - mean2 * s2
  return tuple(a.astype(jnp.float32) for a in (s1, b1, w1, s2, b2, w2))


# --------------------------- pure-JAX reference (check) --------------------- #
def conv_block_ref(x_nchw, params):
  s1, b1, w1, s2, b2, w2 = params
  x = jnp.transpose(x_nchw, (0, 2, 3, 1))
  h = jnp.maximum(x * s1 + b1, 0.0)
  h = jnp.einsum("nhwc,cf->nhwf", h, w1, precision=jax.lax.Precision.HIGHEST)
  h = jnp.maximum(h * s2 + b2, 0.0)
  y = jax.lax.conv_general_dilated(
      h, w2, window_strides=(1, 1), padding="SAME",
      dimension_numbers=("NHWC", "HWIO", "NHWC"),
      precision=jax.lax.Precision.HIGHEST)
  return jnp.transpose(y, (0, 3, 1, 2))


# ------------------------------------ main ---------------------------------- #
if __name__ == "__main__":
  N, H, W = 2, 16, 16
  IN_CHANNELS = 4
  OUT_CHANNELS = 8          # growth rate used by the DenseUnet dense blocks
  NB_FILTER = 64            # -> 256 intermediate channels (nb_filter * 4)

  key = jax.random.PRNGKey(0)
  kx, kp, kx2, kp2 = jax.random.split(key, 4)
  x = jax.random.normal(kx, (N, IN_CHANNELS, H, W), dtype=jnp.float32)  # NCHW
  params = init_conv_block_params(kp, IN_CHANNELS, OUT_CHANNELS, NB_FILTER)

  out = jax.block_until_ready(conv_block_forward(x, params))
  assert out.shape == (N, OUT_CHANNELS, H, W), out.shape
  assert bool(jnp.all(jnp.isfinite(out)))
  ref = jax.block_until_ready(conv_block_ref(x, params))
  np.testing.assert_allclose(np.asarray(out), np.asarray(ref),
                             rtol=2e-2, atol=2e-2)

  # Second check at an unaligned channel count, as produced deep inside a
  # DenseUnet dense block (e.g. 4 + 12*8 = 100 input channels).
  x2 = jax.random.normal(kx2, (N, 100, H, W), dtype=jnp.float32)
  params2 = init_conv_block_params(kp2, 100, OUT_CHANNELS, NB_FILTER)
  out2 = jax.block_until_ready(conv_block_forward(x2, params2))
  ref2 = jax.block_until_ready(conv_block_ref(x2, params2))
  np.testing.assert_allclose(np.asarray(out2), np.asarray(ref2),
                             rtol=2e-2, atol=2e-2)

  print("KERNEL_OK")
</pallas_src>

<mosaic_0001>
module attributes {stable_mosaic.version = 11 : i64} {
  func.func @_conv_block_kernel(%arg0: i32, %arg1: memref<1x256x4xf32, #tpu.memory_space<vmem>>, %arg2: memref<1x4xf32, #tpu.memory_space<vmem>>, %arg3: memref<1x4xf32, #tpu.memory_space<vmem>>, %arg4: memref<4x256xbf16, #tpu.memory_space<vmem>>, %arg5: memref<1x256xf32, #tpu.memory_space<vmem>>, %arg6: memref<3x256x24xbf16, #tpu.memory_space<vmem>>, %arg7: memref<1x256x8xf32, #tpu.memory_space<vmem>>) attributes {dimension_semantics = [#tpu.dimension_semantics<parallel>], iteration_bounds = array<i64: 2>, scalar_prefetch = 0 : i64, scratch_operands = 0 : i64, tpu.core_type = #tpu.core_type<tc>, window_params = [{transform_indices = @transform_0, window_bounds = array<i64: 1, 256, 4>}, {pipeline_mode = #tpu.pipeline_mode<synchronous>, transform_indices = @transform_1, window_bounds = array<i64: 1, 4>}, {pipeline_mode = #tpu.pipeline_mode<synchronous>, transform_indices = @transform_2, window_bounds = array<i64: 1, 4>}, {pipeline_mode = #tpu.pipeline_mode<synchronous>, transform_indices = @transform_3, window_bounds = array<i64: 4, 256>}, {pipeline_mode = #tpu.pipeline_mode<synchronous>, transform_indices = @transform_4, window_bounds = array<i64: 1, 256>}, {pipeline_mode = #tpu.pipeline_mode<synchronous>, transform_indices = @transform_5, window_bounds = array<i64: 3, 256, 24>}, {transform_indices = @transform_6, window_bounds = array<i64: 1, 256, 8>}]} {
    %c0 = arith.constant 0 : index
    %c0_0 = arith.constant 0 : index
    %c0_1 = arith.constant 0 : index
    %0 = vector.load %arg1[%c0, %c0_0, %c0_1] : memref<1x256x4xf32, #tpu.memory_space<vmem>>, vector<1x256x4xf32>
    %1 = vector.shape_cast %0 : vector<1x256x4xf32> to vector<256x4xf32>
    %c0_2 = arith.constant 0 : index
    %c0_3 = arith.constant 0 : index
    %2 = vector.load %arg2[%c0_2, %c0_3] : memref<1x4xf32, #tpu.memory_space<vmem>>, vector<1x4xf32>
    %3 = vector.broadcast %2 : vector<1x4xf32> to vector<256x4xf32>
    %4 = arith.mulf %1, %3 : vector<256x4xf32>
    %c0_4 = arith.constant 0 : index
    %c0_5 = arith.constant 0 : index
    %5 = vector.load %arg3[%c0_4, %c0_5] : memref<1x4xf32, #tpu.memory_space<vmem>>, vector<1x4xf32>
    %6 = vector.broadcast %5 : vector<1x4xf32> to vector<256x4xf32>
    %7 = arith.addf %4, %6 : vector<256x4xf32>
    %cst = arith.constant 0.000000e+00 : f32
    %8 = vector.broadcast %cst : f32 to vector<256x4xf32>
    %9 = arith.maximumf %7, %8 : vector<256x4xf32>
    %10 = arith.truncf %9 : vector<256x4xf32> to vector<256x4xbf16>
    %c0_6 = arith.constant 0 : index
    %c0_7 = arith.constant 0 : index
    %11 = vector.load %arg4[%c0_6, %c0_7] : memref<4x256xbf16, #tpu.memory_space<vmem>>, vector<4x256xbf16>
    %cst_8 = arith.constant dense<0.000000e+00> : vector<256x256xf32>
    %12 = tpu.matmul %10, %11, %cst_8 {dimension_numbers = #tpu.dot_dimension_numbers<[1], [0], [0], [1], [0, 0, 1, 1], [], []>} : vector<256x4xbf16>, vector<4x256xbf16>, vector<256x256xf32> -> vector<256x256xf32>
    %c0_9 = arith.constant 0 : index
    %c0_10 = arith.constant 0 : index
    %13 = vector.load %arg5[%c0_9, %c0_10] : memref<1x256xf32, #tpu.memory_space<vmem>>, vector<1x256xf32>
    %14 = vector.broadcast %13 : vector<1x256xf32> to vector<256x256xf32>
    %15 = arith.addf %12, %14 : vector<256x256xf32>
    %cst_11 = arith.constant 0.000000e+00 : f32
    %16 = vector.broadcast %cst_11 : f32 to vector<256x256xf32>
    %17 = arith.maximumf %15, %16 : vector<256x256xf32>
    %18 = tpu.iota {dimensions = array<i32: 0>} : vector<256x256xi32>
    %c15_i32 = arith.constant 15 : i32
    %19 = vector.broadcast %c15_i32 : i32 to vector<256x256xi32>
    %20 = arith.andi %18, %19 : vector<256x256xi32>
    %21 = arith.truncf %17 : vector<256x256xf32> to vector<256x256xbf16>
    %c0_i32 = arith.constant 0 : i32
    %22 = vector.broadcast %c0_i32 : i32 to vector<256x256xi32>
    %23 = arith.cmpi eq, %20, %22 : vector<256x256xi32>
    %c1_i32 = arith.constant 1 : i32
    %24 = tpu.dynamic_rotate %17 by %c1_i32 dim 0 : vector<256x256xf32>, i32 -> vector<256x256xf32>
    %cst_12 = arith.constant 0.000000e+00 : f32
    %25 = vector.broadcast %cst_12 : f32 to vector<256x256xf32>
    %26 = arith.select %23, %25, %24 : vector<256x256xi1>, vector<256x256xf32>
    %27 = arith.truncf %26 : vector<256x256xf32> to vector<256x256xbf16>
    %c15_i32_13 = arith.constant 15 : i32
    %28 = vector.broadcast %c15_i32_13 : i32 to vector<256x256xi32>
    %29 = arith.cmpi eq, %20, %28 : vector<256x256xi32>
    %c255_i32 = arith.constant 255 : i32
    %30 = tpu.dynamic_rotate %17 by %c255_i32 dim 0 : vector<256x256xf32>, i32 -> vector<256x256xf32>
    %cst_14 = arith.constant 0.000000e+00 : f32
    %31 = vector.broadcast %cst_14 : f32 to vector<256x256xf32>
    %32 = arith.select %29, %31, %30 : vector<256x256xi1>, vector<256x256xf32>
    %33 = arith.truncf %32 : vector<256x256xf32> to vector<256x256xbf16>
    %c0_15 = arith.constant 0 : index
    %c0_16 = arith.constant 0 : index
    %c0_17 = arith.constant 0 : index
    %34 = vector.load %arg6[%c0_15, %c0_16, %c0_17] : memref<3x256x24xbf16, #tpu.memory_space<vmem>>, vector<1x256x24xbf16>
    %35 = vector.shape_cast %34 : vector<1x256x24xbf16> to vector<256x24xbf16>
    %cst_18 = arith.constant dense<0.000000e+00> : vector<256x24xf32>
    %36 = tpu.matmul %27, %35, %cst_18 {dimension_numbers = #tpu.dot_dimension_numbers<[1], [0], [0], [1], [0, 0, 1, 1], [], []>} : vector<256x256xbf16>, vector<256x24xbf16>, vector<256x24xf32> -> vector<256x24xf32>
    %c1 = arith.constant 1 : index
    %c0_19 = arith.constant 0 : index
    %c0_20 = arith.constant 0 : index
    %37 = vector.load %arg6[%c1, %c0_19, %c0_20] : memref<3x256x24xbf16, #tpu.memory_space<vmem>>, vector<1x256x24xbf16>
    %38 = vector.shape_cast %37 : vector<1x256x24xbf16> to vector<256x24xbf16>
    %cst_21 = arith.constant dense<0.000000e+00> : vector<256x24xf32>
    %39 = tpu.matmul %21, %38, %cst_21 {dimension_numbers = #tpu.dot_dimension_numbers<[1], [0], [0], [1], [0, 0, 1, 1], [], []>} : vector<256x256xbf16>, vector<256x24xbf16>, vector<256x24xf32> -> vector<256x24xf32>
    %40 = arith.addf %36, %39 : vector<256x24xf32>
    %c2 = arith.constant 2 : index
    %c0_22 = arith.constant 0 : index
    %c0_23 = arith.constant 0 : index
    %41 = vector.load %arg6[%c2, %c0_22, %c0_23] : memref<3x256x24xbf16, #tpu.memory_space<vmem>>, vector<1x256x24xbf16>
    %42 = vector.shape_cast %41 : vector<1x256x24xbf16> to vector<256x24xbf16>
    %cst_24 = arith.constant dense<0.000000e+00> : vector<256x24xf32>
    %43 = tpu.matmul %33, %42, %cst_24 {dimension_numbers = #tpu.dot_dimension_numbers<[1], [0], [0], [1], [0, 0, 1, 1], [], []>} : vector<256x256xbf16>, vector<256x24xbf16>, vector<256x24xf32> -> vector<256x24xf32>
    %44 = arith.addf %40, %43 : vector<256x24xf32>
    %45 = vector.extract_strided_slice %44 {offsets = [0, 0], sizes = [256, 8], strides = [1, 1]} : vector<256x24xf32> to vector<256x8xf32>
    %46 = vector.extract_strided_slice %44 {offsets = [0, 8], sizes = [256, 8], strides = [1, 1]} : vector<256x24xf32> to vector<256x8xf32>
    %47 = vector.extract_strided_slice %44 {offsets = [0, 16], sizes = [256, 8], strides = [1, 1]} : vector<256x24xf32> to vector<256x8xf32>
    %cst_25 = arith.constant 0.000000e+00 : f32
    %48 = vector.broadcast %cst_25 : f32 to vector<16x8xf32>
    %49 = vector.extract_strided_slice %45 {offsets = [0, 0], sizes = [240, 8], strides = [1, 1]} : vector<256x8xf32> to vector<240x8xf32>
    %50 = tpu.concatenate %48, %49 in 0 : vector<16x8xf32>, vector<240x8xf32> -> vector<256x8xf32>
    %51 = vector.extract_strided_slice %47 {offsets = [16, 0], sizes = [240, 8], strides = [1, 1]} : vector<256x8xf32> to vector<240x8xf32>
    %52 = tpu.concatenate %51, %48 in 0 : vector<240x8xf32>, vector<16x8xf32> -> vector<256x8xf32>
    %53 = arith.addf %46, %50 : vector<256x8xf32>
    %54 = arith.addf %53, %52 : vector<256x8xf32>
    %c0_26 = arith.constant 0 : index
    %c0_27 = arith.constant 0 : index
    %c0_28 = arith.constant 0 : index
    %55 = vector.load %arg7[%c0_26, %c0_27, %c0_28] : memref<1x256x8xf32, #tpu.memory_space<vmem>>, vector<1x256x8xf32>
    %56 = vector.shape_cast %55 : vector<1x256x8xf32> to vector<256x8xf32>
    %57 = vector.shape_cast %54 : vector<256x8xf32> to vector<1x256x8xf32>
    tpu.vector_store %arg7[%c0_26, %c0_27, %c0_28], %57 {strides = array<i32>} : memref<1x256x8xf32, #tpu.memory_space<vmem>>, vector<1x256x8xf32>,
    return
  }
  func.func @transform_0(%arg0: i32) -> (i32, i32, i32) {
    %c0_i32 = arith.constant 0 : i32
    %c0_i32_0 = arith.constant 0 : i32
    %c0_i32_1 = arith.constant 0 : i32
    return %arg0, %c0_i32, %c0_i32_0 : i32, i32, i32
  }
  func.func @transform_1(%arg0: i32) -> (i32, i32) {
    %c0_i32 = arith.constant 0 : i32
    %c0_i32_0 = arith.constant 0 : i32
    %c0_i32_1 = arith.constant 0 : i32
    return %c0_i32, %c0_i32_0 : i32, i32
  }
  func.func @transform_2(%arg0: i32) -> (i32, i32) {
    %c0_i32 = arith.constant 0 : i32
    %c0_i32_0 = arith.constant 0 : i32
    %c0_i32_1 = arith.constant 0 : i32
    return %c0_i32, %c0_i32_0 : i32, i32
  }
  func.func @transform_3(%arg0: i32) -> (i32, i32) {
    %c0_i32 = arith.constant 0 : i32
    %c0_i32_0 = arith.constant 0 : i32
    %c0_i32_1 = arith.constant 0 : i32
    return %c0_i32, %c0_i32_0 : i32, i32
  }
  func.func @transform_4(%arg0: i32) -> (i32, i32) {
    %c0_i32 = arith.constant 0 : i32
    %c0_i32_0 = arith.constant 0 : i32
    %c0_i32_1 = arith.constant 0 : i32
    return %c0_i32, %c0_i32_0 : i32, i32
  }
  func.func @transform_5(%arg0: i32) -> (i32, i32, i32) {
    %c0_i32 = arith.constant 0 : i32
    %c0_i32_0 = arith.constant 0 : i32
    %c0_i32_1 = arith.constant 0 : i32
    %c0_i32_2 = arith.constant 0 : i32
    return %c0_i32, %c0_i32_0, %c0_i32_1 : i32, i32, i32
  }
  func.func @transform_6(%arg0: i32) -> (i32, i32, i32) {
    %c0_i32 = arith.constant 0 : i32
    %c0_i32_0 = arith.constant 0 : i32
    %c0_i32_1 = arith.constant 0 : i32
    return %arg0, %c0_i32, %c0_i32_0 : i32, i32, i32
  }
}

</mosaic_0001>

<llo_original>
// kernel: conv_block_forward.1
$region0: #{conv_block_forward.1}
  #allocation0 [shape = 'u32[]', space=smem, size = 0x4, offset = 0x4, fixed_abs, tag = 'smem constant byte address 0x4 - core index']
  #allocation1 [shape = 'u32[144,128]{1,0:T(1,128)}', space=vmem, size = 0x12000, scoped, tag = 'internal scratch']
  %s0 = inlined_call_operand.vmem [shape: f32[2,256,4], index: 0, kind: input, shape index: {}]
  %s1 = inlined_call_operand.vmem [shape: f32[1,4], index: 1, kind: input, shape index: {}]
  %s2 = inlined_call_operand.vmem [shape: f32[1,4], index: 2, kind: input, shape index: {}]
  %s3 = inlined_call_operand.vmem [shape: bf16[4,256], index: 3, kind: input, shape index: {}]
  %s4 = inlined_call_operand.vmem [shape: f32[1,256], index: 4, kind: input, shape index: {}]
  %s5 = inlined_call_operand.vmem [shape: bf16[3,256,24], index: 5, kind: input, shape index: {}]
  %s6 = inlined_call_operand.vmem [shape: f32[2,256,8], index: 6, kind: output, shape index: {}]
  %s7 = sld [smem:[#allocation0]]
  $region57: #{conv_block_forward.1} parent=0
    _
  %s9 = ssub.s32 1, %s7
  %s10 = scalar_select 0, %s9, %s7
  loop: start=0, step=1, limit=4
  $region2: #{conv_block_forward.1} parent=0 // loop_pre_header
    _
  $region3: #{conv_block_forward.1} parent=0 // loop_header
    %s12 = sphi 0, %s16
    %p13 = scmp.ge.s32.totalorder %s12, 4
    %s22 = sphi 0, %s24
    %s25 = sphi 0, %s22
    %s26 = sphi 0, %s25
    %s42 = sphi 0, %s26
    %s46 = sphi 0, %s46
    %s48 = sphi 0, %s46
    %s49 = sphi 0, %s48
    %s63 = sphi 0, %s49
    %s67 = sphi 0, %s67
    %s69 = sphi 0, %s67
    %s70 = sphi 0, %s69
    %s84 = sphi 0, %s70
    %s88 = sphi 0, %s88
    %s90 = sphi 0, %s88
    %s91 = sphi 0, %s90
    %s105 = sphi 0, %s91
    %s109 = sphi 0, %s109
    %s111 = sphi 0, %s109
    %s112 = sphi 0, %s111
    %s126 = sphi 0, %s112
    %s130 = sphi 0, %s130
    %s132 = sphi 0, %s130
    %s133 = sphi 0, %s132
    %s147 = sphi 0, %s133
    %s153 = sphi 0, %s155
    %s156 = sphi 0, %s153
    %s157 = sphi 0, %s156
    %s173 = sphi 0, %s157
  $region4: #{conv_block_forward.1} parent=0 // loop_header_branch
    %15 = sbr.rel (%p13) target = $region8
  $region5: #{conv_block_forward.1} parent=0 // loop_body
    %s17 = ssub.s32 %s12, 1
    %s18 = ssub.s32 %s12, 2
    %s19 = sadd.s32 %s12, 1
    %s20 = ssub.s32 %s12, %s19
    %p21 = scmp.eq.s32.totalorder %s20, 0
    %s23 = sadd.s32 %s22, 1
    %s24 = scalar_select %p21, %s22, %s23
    %p27 = pneg %p21
    %p28 = scmp.eq.s32.totalorder %s12, 1
    %p29 = por %p27, %p28
    %p30 = scmp.ne.s32.totalorder %s22, %s25
    %p31 = scmp.eq.s32.totalorder %s12, 0
    %p32 = por %p30, %p31
    %p33 = scmp.ne.s32.totalorder %s22, %s25
    %p34 = scmp.eq.s32.totalorder %s17, 1
    %p35 = por %p33, %p34
    %p36 = scmp.ne.s32.totalorder %s25, %s26
    %p37 = scmp.eq.s32.totalorder %s17, 0
    %p38 = por %p36, %p37
    %p39 = scmp.ne.s32.totalorder %s25, %s26
    %p40 = scmp.eq.s32.totalorder %s18, 1
    %p41 = por %p39, %p40
    %p43 = scmp.ne.s32.totalorder %s26, %s42
    %p44 = scmp.eq.s32.totalorder %s18, 0
    %p45 = por %p43, %p44
    %s47 = sadd.s32 %s46, 1
    %p50 = scmp.eq.s32.totalorder %s12, 1
    %p51 = scmp.ne.s32.totalorder %s46, %s48
    %p52 = scmp.eq.s32.totalorder %s12, 0
    %p53 = por %p51, %p52
    %p54 = scmp.ne.s32.totalorder %s46, %s48
    %p55 = scmp.eq.s32.totalorder %s17, 1
    %p56 = por %p54, %p55
    %p57 = scmp.ne.s32.totalorder %s48, %s49
    %p58 = scmp.eq.s32.totalorder %s17, 0
    %p59 = por %p57, %p58
    %p60 = scmp.ne.s32.totalorder %s48, %s49
    %p61 = scmp.eq.s32.totalorder %s18, 1
    %p62 = por %p60, %p61
    %p64 = scmp.ne.s32.totalorder %s49, %s63
    %p65 = scmp.eq.s32.totalorder %s18, 0
    %p66 = por %p64, %p65
    %s68 = sadd.s32 %s67, 1
    %p71 = scmp.eq.s32.totalorder %s12, 1
    %p72 = scmp.ne.s32.totalorder %s67, %s69
    %p73 = scmp.eq.s32.totalorder %s12, 0
    %p74 = por %p72, %p73
    %p75 = scmp.ne.s32.totalorder %s67, %s69
    %p76 = scmp.eq.s32.totalorder %s17, 1
    %p77 = por %p75, %p76
    %p78 = scmp.ne.s32.totalorder %s69, %s70
    %p79 = scmp.eq.s32.totalorder %s17, 0
    %p80 = por %p78, %p79
    %p81 = scmp.ne.s32.totalorder %s69, %s70
    %p82 = scmp.eq.s32.totalorder %s18, 1
    %p83 = por %p81, %p82
    %p85 = scmp.ne.s32.totalorder %s70, %s84
    %p86 = scmp.eq.s32.totalorder %s18, 0
    %p87 = por %p85, %p86
    %s89 = sadd.s32 %s88, 1
    %p92 = scmp.eq.s32.totalorder %s12, 1
    %p93 = scmp.ne.s32.totalorder %s88, %s90
    %p94 = scmp.eq.s32.totalorder %s12, 0
    %p95 = por %p93, %p94
    %p96 = scmp.ne.s32.totalorder %s88, %s90
    %p97 = scmp.eq.s32.totalorder %s17, 1
    %p98 = por %p96, %p97
    %p99 = scmp.ne.s32.totalorder %s90, %s91
    %p100 = scmp.eq.s32.totalorder %s17, 0
    %p101 = por %p99, %p100
    %p102 = scmp.ne.s32.totalorder %s90, %s91
    %p103 = scmp.eq.s32.totalorder %s18, 1
    %p104 = por %p102, %p103
    %p106 = scmp.ne.s32.totalorder %s91, %s105
    %p107 = scmp.eq.s32.totalorder %s18, 0
    %p108 = por %p106, %p107
    %s110 = sadd.s32 %s109, 1
    %p113 = scmp.eq.s32.totalorder %s12, 1
    %p114 = scmp.ne.s32.totalorder %s109, %s111
    %p115 = scmp.eq.s32.totalorder %s12, 0
    %p116 = por %p114, %p115
    %p117 = scmp.ne.s32.totalorder %s109, %s111
    %p118 = scmp.eq.s32.totalorder %s17, 1
    %p119 = por %p117, %p118
    %p120 = scmp.ne.s32.totalorder %s111, %s112
    %p121 = scmp.eq.s32.totalorder %s17, 0
    %p122 = por %p120, %p121
    %p123 = scmp.ne.s32.totalorder %s111, %s112
    %p124 = scmp.eq.s32.totalorder %s18, 1
    %p125 = por %p123, %p124
    %p127 = scmp.ne.s32.totalorder %s112, %s126
    %p128 = scmp.eq.s32.totalorder %s18, 0
    %p129 = por %p127, %p128
    %s131 = sadd.s32 %s130, 1
    %p134 = scmp.eq.s32.totalorder %s12, 1
    %p135 = scmp.ne.s32.totalorder %s130, %s132
    %p136 = scmp.eq.s32.totalorder %s12, 0
    %p137 = por %p135, %p136
    %p138 = scmp.ne.s32.totalorder %s130, %s132
    %p139 = scmp.eq.s32.totalorder %s17, 1
    %p140 = por %p138, %p139
    %p141 = scmp.ne.s32.totalorder %s132, %s133
    %p142 = scmp.eq.s32.totalorder %s17, 0
    %p143 = por %p141, %p142
    %p144 = scmp.ne.s32.totalorder %s132, %s133
    %p145 = scmp.eq.s32.totalorder %s18, 1
    %p146 = por %p144, %p145
    %p148 = scmp.ne.s32.totalorder %s133, %s147
    %p149 = scmp.eq.s32.totalorder %s18, 0
    %p150 = por %p148, %p149
    %s151 = ssub.s32 %s12, %s19
    %p152 = scmp.eq.s32.totalorder %s151, 0
    %s154 = sadd.s32 %s153, 1
    %s155 = scalar_select %p152, %s153, %s154
    %p158 = pneg %p152
    %p159 = scmp.eq.s32.totalorder %s12, 1
    %p160 = por %p158, %p159
    %p161 = scmp.ne.s32.totalorder %s153, %s156
    %p162 = scmp.eq.s32.totalorder %s12, 0
    %p163 = por %p161, %p162
    %p164 = scmp.ne.s32.totalorder %s153, %s156
    %p165 = scmp.eq.s32.totalorder %s17, 1
    %p166 = por %p164, %p165
    %p167 = scmp.ne.s32.totalorder %s156, %s157
    %p168 = scmp.eq.s32.totalorder %s17, 0
    %p169 = por %p167, %p168
    %p170 = scmp.ne.s32.totalorder %s156, %s157
    %p171 = scmp.eq.s32.totalorder %s18, 1
    %p172 = por %p170, %p171
    %p174 = scmp.ne.s32.totalorder %s157, %s173
    %p175 = scmp.eq.s32.totalorder %s18, 0
    %p176 = por %p174, %p175
    %p177 = scmp.le.s32.totalorder 1, %s12
    %p178 = scmp.lt.s32.totalorder %s12, 3
    %p179 = pnand %p177, %p178
    %p180 = pneg %p179
    // Predicated region
    $region9: #{conv_block_forward.1} parent=5 // pred_check
      _
    $region10: #{conv_block_forward.1} parent=5 // pred_check_branch
      %182 = sbr.rel (%p179) target = $region12
    $region11: #{conv_block_forward.1} parent=5 // pred_region
      %s183 = ssub.s32 %s12, 1
      // Predicated region
      $region13: #{conv_block_forward.1} parent=11 // pred_check
        %p184 = pneg %p59
      $region14: #{conv_block_forward.1} parent=11 // pred_check_branch
        %186 = sbr.rel (%p184) target = $region16
      $region15: #{conv_block_forward.1} parent=11 // pred_region
        _
      $region16: #{conv_block_forward.1} parent=11 // pred_fallthru
        _
      // Predicated region
      $region17: #{conv_block_forward.1} parent=11 // pred_check
        %p187 = pneg %p80
      $region18: #{conv_block_forward.1} parent=11 // pred_check_branch
        %189 = sbr.rel (%p187) target = $region20
      $region19: #{conv_block_forward.1} parent=11 // pred_region
        _
      $region20: #{conv_block_forward.1} parent=11 // pred_fallthru
        _
      // Predicated region
      $region21: #{conv_block_forward.1} parent=11 // pred_check
        %p190 = pneg %p101
      $region22: #{conv_block_forward.1} parent=11 // pred_check_branch
        %192 = sbr.rel (%p190) target = $region24
      $region23: #{conv_block_forward.1} parent=11 // pred_region
        _
      $region24: #{conv_block_forward.1} parent=11 // pred_fallthru
        _
      // Predicated region
      $region25: #{conv_block_forward.1} parent=11 // pred_check
        %p193 = pneg %p122
      $region26: #{conv_block_forward.1} parent=11 // pred_check_branch
        %195 = sbr.rel (%p193) target = $region28
      $region27: #{conv_block_forward.1} parent=11 // pred_region
        _
      $region28: #{conv_block_forward.1} parent=11 // pred_fallthru
        _
      // Predicated region
      $region29: #{conv_block_forward.1} parent=11 // pred_check
        %p196 = pneg %p143
      $region30: #{conv_block_forward.1} parent=11 // pred_check_branch
        %198 = sbr.rel (%p196) target = $region32
      $region31: #{conv_block_forward.1} parent=11 // pred_region
        _
      $region32: #{conv_block_forward.1} parent=11 // pred_fallthru
        _
    $region12: #{conv_block_forward.1} parent=5 // pred_fallthru
      _
    %p199 = scmp.lt.s32.totalorder %s12, 2
    // Predicated region
    $region33: #{conv_block_forward.1} parent=5 // pred_check
      %p200 = pneg %p199
    $region34: #{conv_block_forward.1} parent=5 // pred_check_branch
      %202 = sbr.rel (%p200) target = $region36
    $region35: #{conv_block_forward.1} parent=5 // pred_region
      // Predicated region
      $region37: #{conv_block_forward.1} parent=35 // pred_check
        %p203 = pneg %p32
      $region38: #{conv_block_forward.1} parent=35 // pred_check_branch
        %205 = sbr.rel (%p203) target = $region40
      $region39: #{conv_block_forward.1} parent=35 // pred_region
        %p206 = scmp.lt.s32.totalorder %s12, 1
        %s207 = scalar_select %p206, %s12, 1
        %s208 = smul.addr %s207, 32
        %s209 = smul.addr %s208, 8
        %s210 = scalar_lea.vmem %s0, %s209
      $region40: #{conv_block_forward.1} parent=35 // pred_fallthru
        _
    $region36: #{conv_block_forward.1} parent=5 // pred_fallthru
      _
    %p211 = scmp.le.s32.totalorder 1, %s12
    %p212 = scmp.lt.s32.totalorder %s12, 3
    %p213 = pnand %p211, %p212
    %p214 = pneg %p213
    // Predicated region
    $region41: #{conv_block_forward.1} parent=5 // pred_check
      _
    $region42: #{conv_block_forward.1} parent=5 // pred_check_branch
      %216 = sbr.rel (%p213) target = $region44
    $region43: #{conv_block_forward.1} parent=5 // pred_region
      %s217 = ssub.s32 %s12, 1
      %p218 = scmp.lt.s32.totalorder %s17, 1
      %s219 = scalar_select %p218, %s17, 1
      %s220 = smul.addr %s219, 32
      %s221 = smul.addr %s220, 8
      %s222 = scalar_lea.vmem %s0, %s221
      %p223 = pneg %p38
      %p224 = pneg %p35
      %p225 = pneg %p59
      %p226 = pneg %p56
      %p227 = pneg %p80
      %p228 = pneg %p77
      %p229 = pneg %p101
      %p230 = pneg %p98
      %p231 = pneg %p122
      %p232 = pneg %p119
      %p233 = pneg %p143
      %p234 = pneg %p140
      %p235 = pneg %p169
      %p236 = pneg %p166
      %p237 = scmp.lt.s32.totalorder %s17, 1
      %s238 = scalar_select %p237, %s17, 1
      %s239 = smul.addr %s238, 32
      %s240 = smul.addr %s239, 8
      %s241 = scalar_lea.vmem %s6, %s240
      %p242 = scmp.lt.s32.totalorder %s17, 1
      %s243 = scalar_select %p242, %s17, 1
      %s244 = smul.addr %s243, 32
      %s245 = smul.addr %s244, 8
      %s246 = scalar_lea.vmem %s0, %s245
      %p247 = scmp.lt.s32.totalorder %s17, 1
      %s248 = scalar_select %p247, %s17, 1
      %s249 = smul.addr %s248, 32
      %s250 = smul.addr %s249, 8
      %s251 = scalar_lea.vmem %s6, %s250
      %v253 = vld [vmem:[%s246] sm:$0xff]
      %v254 = vld [vmem:[%s246 + $0x8] sm:$0xff]
      %v255 = vld [vmem:[%s246 + $0x10] sm:$0xff]
      %v256 = vld [vmem:[%s246 + $0x18] sm:$0xff]
      %v257 = vld [vmem:[%s246 + $0x20] sm:$0xff]
      %v258 = vld [vmem:[%s246 + $0x28] sm:$0xff]
      %v259 = vld [vmem:[%s246 + $0x30] sm:$0xff]
      %v260 = vld [vmem:[%s246 + $0x38] sm:$0xff]
      %v261 = vld [vmem:[%s246 + $0x40] sm:$0xff]
      %v262 = vld [vmem:[%s246 + $0x48] sm:$0xff]
      %v263 = vld [vmem:[%s246 + $0x50] sm:$0xff]
      %v264 = vld [vmem:[%s246 + $0x58] sm:$0xff]
      %v265 = vld [vmem:[%s246 + $0x60] sm:$0xff]
      %v266 = vld [vmem:[%s246 + $0x68] sm:$0xff]
      %v267 = vld [vmem:[%s246 + $0x70] sm:$0xff]
      %v268 = vld [vmem:[%s246 + $0x78] sm:$0xff]
      %v269 = vld [vmem:[%s246 + $0x80] sm:$0xff]
      %v270 = vld [vmem:[%s246 + $0x88] sm:$0xff]
      %v271 = vld [vmem:[%s246 + $0x90] sm:$0xff]
      %v272 = vld [vmem:[%s246 + $0x98] sm:$0xff]
      %v273 = vld [vmem:[%s246 + $0xa0] sm:$0xff]
      %v274 = vld [vmem:[%s246 + $0xa8] sm:$0xff]
      %v275 = vld [vmem:[%s246 + $0xb0] sm:$0xff]
      %v276 = vld [vmem:[%s246 + $0xb8] sm:$0xff]
      %v277 = vld [vmem:[%s246 + $0xc0] sm:$0xff]
      %v278 = vld [vmem:[%s246 + $0xc8] sm:$0xff]
      %v279 = vld [vmem:[%s246 + $0xd0] sm:$0xff]
      %v280 = vld [vmem:[%s246 + $0xd8] sm:$0xff]
      %v281 = vld [vmem:[%s246 + $0xe0] sm:$0xff]
      %v282 = vld [vmem:[%s246 + $0xe8] sm:$0xff]
      %v283 = vld [vmem:[%s246 + $0xf0] sm:$0xff]
      %v284 = vld [vmem:[%s246 + $0xf8] sm:$0xff]
      %v285 = vld [vmem:[%s1] sm:$0x1]
      %v287 = vlaneseq
      %v288 = vshrl.u32 %v287, 7
      %v289 = vsub.s32 0, %v288
      %v290 = vrot.slane %v285, %v289
      %v292 = vmul.f32 %v253, %v290
      %v293 = vmul.f32 %v254, %v290
      %v294 = vmul.f32 %v255, %v290
      %v295 = vmul.f32 %v256, %v290
      %v296 = vmul.f32 %v257, %v290
      %v297 = vmul.f32 %v258, %v290
      %v298 = vmul.f32 %v259, %v290
      %v299 = vmul.f32 %v260, %v290
      %v300 = vmul.f32 %v261, %v290
      %v301 = vmul.f32 %v262, %v290
      %v302 = vmul.f32 %v263, %v290
      %v303 = vmul.f32 %v264, %v290
      %v304 = vmul.f32 %v265, %v290
      %v305 = vmul.f32 %v266, %v290
      %v306 = vmul.f32 %v267, %v290
      %v307 = vmul.f32 %v268, %v290
      %v308 = vmul.f32 %v269, %v290
      %v309 = vmul.f32 %v270, %v290
      %v310 = vmul.f32 %v271, %v290
      %v311 = vmul.f32 %v272, %v290
      %v312 = vmul.f32 %v273, %v290
      %v313 = vmul.f32 %v274, %v290
      %v314 = vmul.f32 %v275, %v290
      %v315 = vmul.f32 %v276, %v290
      %v316 = vmul.f32 %v277, %v290
      %v317 = vmul.f32 %v278, %v290
      %v318 = vmul.f32 %v279, %v290
      %v319 = vmul.f32 %v280, %v290
      %v320 = vmul.f32 %v281, %v290
      %v321 = vmul.f32 %v282, %v290
      %v322 = vmul.f32 %v283, %v290
      %v323 = vmul.f32 %v284, %v290
      %v324 = vld [vmem:[%s2] sm:$0x1]
      %v326 = vlaneseq
      %v327 = vshrl.u32 %v326, 7
      %v328 = vsub.s32 0, %v327
      %v329 = vrot.slane %v324, %v328
      %v331 = vadd.f32 %v292, %v329
      %v332 = vadd.f32 %v293, %v329
      %v333 = vadd.f32 %v294, %v329
      %v334 = vadd.f32 %v295, %v329
      %v335 = vadd.f32 %v296, %v329
      %v336 = vadd.f32 %v297, %v329
      %v337 = vadd.f32 %v298, %v329
      %v338 = vadd.f32 %v299, %v329
      %v339 = vadd.f32 %v300, %v329
      %v340 = vadd.f32 %v301, %v329
      %v341 = vadd.f32 %v302, %v329
      %v342 = vadd.f32 %v303, %v329
      %v343 = vadd.f32 %v304, %v329
      %v344 = vadd.f32 %v305, %v329
      %v345 = vadd.f32 %v306, %v329
      %v346 = vadd.f32 %v307, %v329
      %v347 = vadd.f32 %v308, %v329
      %v348 = vadd.f32 %v309, %v329
      %v349 = vadd.f32 %v310, %v329
      %v350 = vadd.f32 %v311, %v329
      %v351 = vadd.f32 %v312, %v329
      %v352 = vadd.f32 %v313, %v329
      %v353 = vadd.f32 %v314, %v329
      %v354 = vadd.f32 %v315, %v329
      %v355 = vadd.f32 %v316, %v329
      %v356 = vadd.f32 %v317, %v329
      %v357 = vadd.f32 %v318, %v329
      %v358 = vadd.f32 %v319, %v329
      %v359 = vadd.f32 %v320, %v329
      %v360 = vadd.f32 %v321, %v329
      %v361 = vadd.f32 %v322, %v329
      %v362 = vadd.f32 %v323, %v329
      %v363 = vmax.f32 %v331, 0.0
      %v364 = vmax.f32 %v332, 0.0
      %v365 = vmax.f32 %v333, 0.0
      %v366 = vmax.f32 %v334, 0.0
      %v367 = vmax.f32 %v335, 0.0
      %v368 = vmax.f32 %v336, 0.0
      %v369 = vmax.f32 %v337, 0.0
      %v370 = vmax.f32 %v338, 0.0
      %v371 = vmax.f32 %v339, 0.0
      %v372 = vmax.f32 %v340, 0.0
      %v373 = vmax.f32 %v341, 0.0
      %v374 = vmax.f32 %v342, 0.0
      %v375 = vmax.f32 %v343, 0.0
      %v376 = vmax.f32 %v344, 0.0
      %v377 = vmax.f32 %v345, 0.0
      %v378 = vmax.f32 %v346, 0.0
      %v379 = vmax.f32 %v347, 0.0
      %v380 = vmax.f32 %v348, 0.0
      %v381 = vmax.f32 %v349, 0.0
      %v382 = vmax.f32 %v350, 0.0
      %v383 = vmax.f32 %v351, 0.0
      %v384 = vmax.f32 %v352, 0.0
      %v385 = vmax.f32 %v353, 0.0
      %v386 = vmax.f32 %v354, 0.0
      %v387 = vmax.f32 %v355, 0.0
      %v388 = vmax.f32 %v356, 0.0
      %v389 = vmax.f32 %v357, 0.0
      %v390 = vmax.f32 %v358, 0.0
      %v391 = vmax.f32 %v359, 0.0
      %v392 = vmax.f32 %v360, 0.0
      %v393 = vmax.f32 %v361, 0.0
      %v394 = vmax.f32 %v362, 0.0
      %v395 = vpack.c.bf16 %v364, %v363
      %v396 = vpack.c.bf16 %v366, %v365
      %v397 = vpack.c.bf16 %v368, %v367
      %v398 = vpack.c.bf16 %v370, %v369
      %v399 = vpack.c.bf16 %v372, %v371
      %v400 = vpack.c.bf16 %v374, %v373
      %v401 = vpack.c.bf16 %v376, %v375
      %v402 = vpack.c.bf16 %v378, %v377
      %v403 = vpack.c.bf16 %v380, %v379
      %v404 = vpack.c.bf16 %v382, %v381
      %v405 = vpack.c.bf16 %v384, %v383
      %v406 = vpack.c.bf16 %v386, %v385
      %v407 = vpack.c.bf16 %v388, %v387
      %v408 = vpack.c.bf16 %v390, %v389
      %v409 = vpack.c.bf16 %v392, %v391
      %v410 = vpack.c.bf16 %v394, %v393
      %v411 = vld [vmem:[%s3] sm:$0xf]
      %v412 = vld [vmem:[%s4] sm:$0x3]
      %v414 = vlaneseq
      %v415 = vshrl.u32 %v414, 7
      %v416 = vsub.s32 0, %v415
      %v417 = vrot.slane %v412, %v416
      %v418 = vlaneseq
      %v419 = vshrl.u32 %v418, 7
      %v420 = vsub.s32 1, %v419
      %v421 = vrot.slane %v412, %v420
      %v426 = vunpack.c.l.s4 1983009808
      %v427 = vunpack.c.0.s8 %v426
      %v428 = vlaneseq
      %v429 = vshrl.u32 %v428, 7
      %v430 = vsub.s32 %v427, %v429
      %v431 = vrot.slane %v411, %v430
      %v432 = vcombine.high %v431, %v431
      %vm433 = vcmask 31744
      %v435 = vsel %vm433, %v395, 0
      %v438 = vsel %vm433, %v396, 0
      %v441 = vsel %vm433, %v397, 0
      %v444 = vsel %vm433, %v398, 0
      %v447 = vsel %vm433, %v399, 0
      %v450 = vsel %vm433, %v400, 0
      %v453 = vsel %vm433, %v401, 0
      %v456 = vsel %vm433, %v402, 0
      %v459 = vsel %vm433, %v403, 0
      %v462 = vsel %vm433, %v404, 0
      %v465 = vsel %vm433, %v405, 0
      %v468 = vsel %vm433, %v406, 0
      %v471 = vsel %vm433, %v407, 0
      %v474 = vsel %vm433, %v408, 0
      %v477 = vsel %vm433, %v409, 0
      %v480 = vsel %vm433, %v410, 0
      %vm482 = vcmask 1041408
      %v484 = vsel %vm482, %v431, 0
      %v487 = vsel %vm482, %v432, 0
      %489 = vmatprep.subr.bf16.mxu0 %v487
      %490 = vmatpush1.bf16.msra.mxu0 %v484
      %491 = vmatprep.subr.bf16.mxu0 0
      %492 = vmatpush1.bf16.msra.mxu0 0
      %493 = vmatprep.subr.bf16.mxu0 0
      %494 = vmatpush1.bf16.msra.mxu0 0
      %495 = vmatprep.subr.bf16.mxu0 0
      %496 = vmatpush1.bf16.msra.mxu0 0
      %497 = vmatprep.subr.bf16.mxu0 0
      %498 = vmatpush1.bf16.msra.mxu0 0
      %499 = vmatprep.subr.bf16.mxu0 0
      %500 = vmatpush1.bf16.msra.mxu0 0
      %501 = vmatprep.subr.bf16.mxu0 0
      %502 = vmatpush1.bf16.msra.mxu0 0
      %503 = vmatprep.subr.bf16.mxu0 0
      %504 = vmatpush1.bf16.msra.mxu0 0
      %505 = vmatprep.subr.bf16.mxu0 0
      %506 = vmatpush1.bf16.msra.mxu0 0
      %507 = vmatprep.subr.bf16.mxu0 0
      %508 = vmatpush1.bf16.msra.mxu0 0
      %509 = vmatprep.subr.bf16.mxu0 0
      %510 = vmatpush1.bf16.msra.mxu0 0
      %511 = vmatprep.subr.bf16.mxu0 0
      %512 = vmatpush1.bf16.msra.mxu0 0
      %513 = vmatprep.subr.bf16.mxu0 0
      %514 = vmatpush1.bf16.msra.mxu0 0
      %515 = vmatprep.subr.bf16.mxu0 0
      %516 = vmatpush1.bf16.msra.mxu0 0
      %517 = vmatprep.subr.bf16.mxu0 0
      %518 = vmatpush1.bf16.msra.mxu0 0
      %519 = vmatprep.subr.bf16.mxu0 0
      %520 = vmatpush1.bf16.msra.mxu0 0
      %521 = vmatprep.mubr.bf16.mxu0 0
      %522 = vmatmul.mubr.bf16.gmra.mrb[0].mxu0 %v435
      %v523 = vpop.f32.mrb[0].mxu0
      %v524 = vadd.f32 %v417, %v523
      %v525 = vpop.f32.mrb[0].mxu0
      %v526 = vadd.f32 %v421, %v525
      %v527 = vpop.f32.mrb[0].mxu0
      %v528 = vadd.f32 %v417, %v527
      %v529 = vpop.f32.mrb[0].mxu0
      %v530 = vadd.f32 %v421, %v529
      %531 = vmatprep.mubr.bf16.mxu0 0
      %532 = vmatmul.mubr.bf16.gmra.mrb[0].mxu0 %v438
      %v533 = vpop.f32.mrb[0].mxu0
      %v534 = vadd.f32 %v417, %v533
      %v535 = vpop.f32.mrb[0].mxu0
      %v536 = vadd.f32 %v421, %v535
      %v537 = vpop.f32.mrb[0].mxu0
      %v538 = vadd.f32 %v417, %v537
      %v539 = vpop.f32.mrb[0].mxu0
      %v540 = vadd.f32 %v421, %v539
      %541 = vmatprep.mubr.bf16.mxu0 0
      %542 = vmatmul.mubr.bf16.gmra.mrb[0].mxu0 %v441
      %v543 = vpop.f32.mrb[0].mxu0
      %v544 = vadd.f32 %v417, %v543
      %v545 = vpop.f32.mrb[0].mxu0
      %v546 = vadd.f32 %v421, %v545
      %v547 = vpop.f32.mrb[0].mxu0
      %v548 = vadd.f32 %v417, %v547
      %v549 = vpop.f32.mrb[0].mxu0
      %v550 = vadd.f32 %v421, %v549
      %551 = vmatprep.mubr.bf16.mxu0 0
      %552 = vmatmul.mubr.bf16.gmra.mrb[0].mxu0 %v444
      %v553 = vpop.f32.mrb[0].mxu0
      %v554 = vadd.f32 %v417, %v553
      %v555 = vpop.f32.mrb[0].mxu0
      %v556 = vadd.f32 %v421, %v555
      %v557 = vpop.f32.mrb[0].mxu0
      %v558 = vadd.f32 %v417, %v557
      %v559 = vpop.f32.mrb[0].mxu0
      %v560 = vadd.f32 %v421, %v559
      %561 = vmatprep.mubr.bf16.mxu0 0
      %562 = vmatmul.mubr.bf16.gmra.mrb[0].mxu0 %v447
      %v563 = vpop.f32.mrb[0].mxu0
      %v564 = vadd.f32 %v417, %v563
      %v565 = vpop.f32.mrb[0].mxu0
      %v566 = vadd.f32 %v421, %v565
      %v567 = vpop.f32.mrb[0].mxu0
      %v568 = vadd.f32 %v417, %v567
      %v569 = vpop.f32.mrb[0].mxu0
      %v570 = vadd.f32 %v421, %v569
      %571 = vmatprep.mubr.bf16.mxu0 0
      %572 = vmatmul.mubr.bf16.gmra.mrb[0].mxu0 %v450
      %v573 = vpop.f32.mrb[0].mxu0
      %v574 = vadd.f32 %v417, %v573
      %v575 = vpop.f32.mrb[0].mxu0
      %v576 = vadd.f32 %v421, %v575
      %v577 = vpop.f32.mrb[0].mxu0
      %v578 = vadd.f32 %v417, %v577
      %v579 = vpop.f32.mrb[0].mxu0
      %v580 = vadd.f32 %v421, %v579
      %581 = vmatprep.mubr.bf16.mxu0 0
      %582 = vmatmul.mubr.bf16.gmra.mrb[0].mxu0 %v453
      %v583 = vpop.f32.mrb[0].mxu0
      %v584 = vadd.f32 %v417, %v583
      %v585 = vpop.f32.mrb[0].mxu0
      %v586 = vadd.f32 %v421, %v585
      %v587 = vpop.f32.mrb[0].mxu0
      %v588 = vadd.f32 %v417, %v587
      %v589 = vpop.f32.mrb[0].mxu0
      %v590 = vadd.f32 %v421, %v589
      %591 = vmatprep.mubr.bf16.mxu0 0
      %592 = vmatmul.mubr.bf16.gmra.mrb[0].mxu0 %v456
      %v593 = vpop.f32.mrb[0].mxu0
      %v594 = vadd.f32 %v417, %v593
      %v595 = vpop.f32.mrb[0].mxu0
      %v596 = vadd.f32 %v421, %v595
      %v597 = vpop.f32.mrb[0].mxu0
      %v598 = vadd.f32 %v417, %v597
      %v599 = vpop.f32.mrb[0].mxu0
      %v600 = vadd.f32 %v421, %v599
      %601 = vmatprep.mubr.bf16.mxu0 0
      %602 = vmatmul.mubr.bf16.gmra.mrb[0].mxu0 %v459
      %v603 = vpop.f32.mrb[0].mxu0
      %v604 = vadd.f32 %v417, %v603
      %v605 = vpop.f32.mrb[0].mxu0
      %v606 = vadd.f32 %v421, %v605
      %v607 = vpop.f32.mrb[0].mxu0
      %v608 = vadd.f32 %v417, %v607
      %v609 = vpop.f32.mrb[0].mxu0
      %v610 = vadd.f32 %v421, %v609
      %611 = vmatprep.mubr.bf16.mxu0 0
      %612 = vmatmul.mubr.bf16.gmra.mrb[0].mxu0 %v462
      %v613 = vpop.f32.mrb[0].mxu0
      %v614 = vadd.f32 %v417, %v613
      %v615 = vpop.f32.mrb[0].mxu0
      %v616 = vadd.f32 %v421, %v615
      %v617 = vpop.f32.mrb[0].mxu0
      %v618 = vadd.f32 %v417, %v617
      %v619 = vpop.f32.mrb[0].mxu0
      %v620 = vadd.f32 %v421, %v619
      %621 = vmatprep.mubr.bf16.mxu0 0
      %622 = vmatmul.mubr.bf16.gmra.mrb[0].mxu0 %v465
      %v623 = vpop.f32.mrb[0].mxu0
      %v624 = vadd.f32 %v417, %v623
      %v625 = vpop.f32.mrb[0].mxu0
      %v626 = vadd.f32 %v421, %v625
      %v627 = vpop.f32.mrb[0].mxu0
      %v628 = vadd.f32 %v417, %v627
      %v629 = vpop.f32.mrb[0].mxu0
      %v630 = vadd.f32 %v421, %v629
      %631 = vmatprep.mubr.bf16.mxu0 0
      %632 = vmatmul.mubr.bf16.gmra.mrb[0].mxu0 %v468
      %v633 = vpop.f32.mrb[0].mxu0
      %v634 = vadd.f32 %v417, %v633
      %v635 = vpop.f32.mrb[0].mxu0
      %v636 = vadd.f32 %v421, %v635
      %v637 = vpop.f32.mrb[0].mxu0
      %v638 = vadd.f32 %v417, %v637
      %v639 = vpop.f32.mrb[0].mxu0
      %v640 = vadd.f32 %v421, %v639
      %641 = vmatprep.mubr.bf16.mxu0 0
      %642 = vmatmul.mubr.bf16.gmra.mrb[0].mxu0 %v471
      %v643 = vpop.f32.mrb[0].mxu0
      %v644 = vadd.f32 %v417, %v643
      %v645 = vpop.f32.mrb[0].mxu0
      %v646 = vadd.f32 %v421, %v645
      %v647 = vpop.f32.mrb[0].mxu0
      %v648 = vadd.f32 %v417, %v647
      %v649 = vpop.f32.mrb[0].mxu0
      %v650 = vadd.f32 %v421, %v649
      %651 = vmatprep.mubr.bf16.mxu0 0
      %652 = vmatmul.mubr.bf16.gmra.mrb[0].mxu0 %v474
      %v653 = vpop.f32.mrb[0].mxu0
      %v654 = vadd.f32 %v417, %v653
      %v655 = vpop.f32.mrb[0].mxu0
      %v656 = vadd.f32 %v421, %v655
      %v657 = vpop.f32.mrb[0].mxu0
      %v658 = vadd.f32 %v417, %v657
      %v659 = vpop.f32.mrb[0].mxu0
      %v660 = vadd.f32 %v421, %v659
      %661 = vmatprep.mubr.bf16.mxu0 0
      %662 = vmatmul.mubr.bf16.gmra.mrb[0].mxu0 %v477
      %v663 = vpop.f32.mrb[0].mxu0
      %v664 = vadd.f32 %v417, %v663
      %v665 = vpop.f32.mrb[0].mxu0
      %v666 = vadd.f32 %v421, %v665
      %v667 = vpop.f32.mrb[0].mxu0
      %v668 = vadd.f32 %v417, %v667
      %v669 = vpop.f32.mrb[0].mxu0
      %v670 = vadd.f32 %v421, %v669
      %671 = vmatprep.mubr.bf16.mxu0 0
      %672 = vmatmul.mubr.bf16.gmra.mrb[0].mxu0 %v480
      %v673 = vpop.f32.mrb[0].mxu0
      %v674 = vadd.f32 %v417, %v673
      %v675 = vpop.f32.mrb[0].mxu0
      %v676 = vadd.f32 %v421, %v675
      %v677 = vpop.f32.mrb[0].mxu0
      %v678 = vadd.f32 %v417, %v677
      %v679 = vpop.f32.mrb[0].mxu0
      %v680 = vadd.f32 %v421, %v679
      %681 = vdwg.mxu0
      %v682 = vmax.f32 %v524, 0.0
      %v683 = vmax.f32 %v526, 0.0
      %v684 = vmax.f32 %v528, 0.0
      %v685 = vmax.f32 %v530, 0.0
      %v686 = vmax.f32 %v534, 0.0
      %v687 = vmax.f32 %v536, 0.0
      %v688 = vmax.f32 %v538, 0.0
      %v689 = vmax.f32 %v540, 0.0
      %v690 = vmax.f32 %v544, 0.0
      %v691 = vmax.f32 %v546, 0.0
      %v692 = vmax.f32 %v548, 0.0
      %v693 = vmax.f32 %v550, 0.0
      %v694 = vmax.f32 %v554, 0.0
      %v695 = vmax.f32 %v556, 0.0
      %v696 = vmax.f32 %v558, 0.0
      %v697 = vmax.f32 %v560, 0.0
      %v698 = vmax.f32 %v564, 0.0
      %v699 = vmax.f32 %v566, 0.0
      %v700 = vmax.f32 %v568, 0.0
      %v701 = vmax.f32 %v570, 0.0
      %v702 = vmax.f32 %v574, 0.0
      %v703 = vmax.f32 %v576, 0.0
      %v704 = vmax.f32 %v578, 0.0
      %v705 = vmax.f32 %v580, 0.0
      %v706 = vmax.f32 %v584, 0.0
      %v707 = vmax.f32 %v586, 0.0
      %v708 = vmax.f32 %v588, 0.0
      %v709 = vmax.f32 %v590, 0.0
      %v710 = vmax.f32 %v594, 0.0
      %v711 = vmax.f32 %v596, 0.0
      %v712 = vmax.f32 %v598, 0.0
      %v713 = vmax.f32 %v600, 0.0
      %v714 = vmax.f32 %v604, 0.0
      %v715 = vmax.f32 %v606, 0.0
      %v716 = vmax.f32 %v608, 0.0
      %v717 = vmax.f32 %v610, 0.0
      %v718 = vmax.f32 %v614, 0.0
      %v719 = vmax.f32 %v616, 0.0
      %v720 = vmax.f32 %v618, 0.0
      %v721 = vmax.f32 %v620, 0.0
      %v722 = vmax.f32 %v624, 0.0
      %v723 = vmax.f32 %v626, 0.0
      %v724 = vmax.f32 %v628, 0.0
      %v725 = vmax.f32 %v630, 0.0
      %v726 = vmax.f32 %v634, 0.0
      %v727 = vmax.f32 %v636, 0.0
      %v728 = vmax.f32 %v638, 0.0
      %v729 = vmax.f32 %v640, 0.0
      %v730 = vmax.f32 %v644, 0.0
      %v731 = vmax.f32 %v646, 0.0
      %v732 = vmax.f32 %v648, 0.0
      %v733 = vmax.f32 %v650, 0.0
      %v734 = vmax.f32 %v654, 0.0
      %v735 = vmax.f32 %v656, 0.0
      %v736 = vmax.f32 %v658, 0.0
      %v737 = vmax.f32 %v660, 0.0
      %v738 = vmax.f32 %v664, 0.0
      %v739 = vmax.f32 %v666, 0.0
      %v740 = vmax.f32 %v668, 0.0
      %v741 = vmax.f32 %v670, 0.0
      %v742 = vmax.f32 %v674, 0.0
      %v743 = vmax.f32 %v676, 0.0
      %v744 = vmax.f32 %v678, 0.0
      %v745 = vmax.f32 %v680, 0.0
      %v746 = vlaneseq
      %v747 = vshrl.u32 %v746, 7
      %v748 = vadd.s32 %v747, 8
      %v749 = vadd.s32 %v747, 16
      %v750 = vadd.s32 %v747, 24
      %v751 = vadd.s32 %v747, 32
      %v752 = vadd.s32 %v747, 40
      %v753 = vadd.s32 %v747, 48
      %v754 = vadd.s32 %v747, 56
      %v755 = vadd.s32 %v747, 64
      %v756 = vadd.s32 %v747, 72
      %v757 = vadd.s32 %v747, 80
      %v758 = vadd.s32 %v747, 88
      %v759 = vadd.s32 %v747, 96
      %v760 = vadd.s32 %v747, 104
      %v761 = vadd.s32 %v747, 112
      %v762 = vadd.s32 %v747, 120
      %v763 = vadd.s32 %v747, 128
      %v764 = vadd.s32 %v747, 136
      %v765 = vadd.s32 %v747, 144
      %v766 = vadd.s32 %v747, 152
      %v767 = vadd.s32 %v747, 160
      %v768 = vadd.s32 %v747, 168
      %v769 = vadd.s32 %v747, 176
      %v770 = vadd.s32 %v747, 184
      %v771 = vadd.s32 %v747, 192
      %v772 = vadd.s32 %v747, 200
      %v773 = vadd.s32 %v747, 208
      %v774 = vadd.s32 %v747, 216
      %v775 = vadd.s32 %v747, 224
      %v776 = vadd.s32 %v747, 232
      %v777 = vadd.s32 %v747, 240
      %v778 = vadd.s32 %v747, 248
      %v779 = vand.u32 %v747, 15
      %v780 = vand.u32 %v748, 15
      %v781 = vand.u32 %v749, 15
      %v782 = vand.u32 %v750, 15
      %v783 = vand.u32 %v751, 15
      %v784 = vand.u32 %v752, 15
      %v785 = vand.u32 %v753, 15
      %v786 = vand.u32 %v754, 15
      %v787 = vand.u32 %v755, 15
      %v788 = vand.u32 %v756, 15
      %v789 = vand.u32 %v757, 15
      %v790 = vand.u32 %v758, 15
      %v791 = vand.u32 %v759, 15
      %v792 = vand.u32 %v760, 15
      %v793 = vand.u32 %v761, 15
      %v794 = vand.u32 %v762, 15
      %v795 = vand.u32 %v763, 15
      %v796 = vand.u32 %v764, 15
      %v797 = vand.u32 %v765, 15
      %v798 = vand.u32 %v766, 15
      %v799 = vand.u32 %v767, 15
      %v800 = vand.u32 %v768, 15
      %v801 = vand.u32 %v769, 15
      %v802 = vand.u32 %v770, 15
      %v803 = vand.u32 %v771, 15
      %v804 = vand.u32 %v772, 15
      %v805 = vand.u32 %v773, 15
      %v806 = vand.u32 %v774, 15
      %v807 = vand.u32 %v775, 15
      %v808 = vand.u32 %v776, 15
      %v809 = vand.u32 %v777, 15
      %v810 = vand.u32 %v778, 15
      %v811 = vpack.c.bf16 %v684, %v682
      %v812 = vpack.c.bf16 %v685, %v683
      %v813 = vpack.c.bf16 %v688, %v686
      %v814 = vpack.c.bf16 %v689, %v687
      %v815 = vpack.c.bf16 %v692, %v690
      %v816 = vpack.c.bf16 %v693, %v691
      %v817 = vpack.c.bf16 %v696, %v694
      %v818 = vpack.c.bf16 %v697, %v695
      %v819 = vpack.c.bf16 %v700, %v698
      %v820 = vpack.c.bf16 %v701, %v699
      %v821 = vpack.c.bf16 %v704, %v702
      %v822 = vpack.c.bf16 %v705, %v703
      %v823 = vpack.c.bf16 %v708, %v706
      %v824 = vpack.c.bf16 %v709, %v707
      %v825 = vpack.c.bf16 %v712, %v710
      %v826 = vpack.c.bf16 %v713, %v711
      %v827 = vpack.c.bf16 %v716, %v714
      %v828 = vpack.c.bf16 %v717, %v715
      %v829 = vpack.c.bf16 %v720, %v718
      %v830 = vpack.c.bf16 %v721, %v719
      %v831 = vpack.c.bf16 %v724, %v722
      %v832 = vpack.c.bf16 %v725, %v723
      %v833 = vpack.c.bf16 %v728, %v726
      %v834 = vpack.c.bf16 %v729, %v727
      %v835 = vpack.c.bf16 %v732, %v730
      %v836 = vpack.c.bf16 %v733, %v731
      %v837 = vpack.c.bf16 %v736, %v734
      %v838 = vpack.c.bf16 %v737, %v735
      %v839 = vpack.c.bf16 %v740, %v738
      %v840 = vpack.c.bf16 %v741, %v739
      %v841 = vpack.c.bf16 %v744, %v742
      %v842 = vpack.c.bf16 %v745, %v743
      %vm843 = vcmp.eq.s32.totalorder %v779, 0
      %vm844 = vcmp.eq.s32.totalorder %v780, 0
      %vm845 = vcmp.eq.s32.totalorder %v781, 0
      %vm846 = vcmp.eq.s32.totalorder %v782, 0
      %vm847 = vcmp.eq.s32.totalorder %v783, 0
      %vm848 = vcmp.eq.s32.totalorder %v784, 0
      %vm849 = vcmp.eq.s32.totalorder %v785, 0
      %vm850 = vcmp.eq.s32.totalorder %v786, 0
      %vm851 = vcmp.eq.s32.totalorder %v787, 0
      %vm852 = vcmp.eq.s32.totalorder %v788, 0
      %vm853 = vcmp.eq.s32.totalorder %v789, 0
      %vm854 = vcmp.eq.s32.totalorder %v790, 0
      %vm855 = vcmp.eq.s32.totalorder %v791, 0
      %vm856 = vcmp.eq.s32.totalorder %v792, 0
      %vm857 = vcmp.eq.s32.totalorder %v793, 0
      %vm858 = vcmp.eq.s32.totalorder %v794, 0
      %vm859 = vcmp.eq.s32.totalorder %v795, 0
      %vm860 = vcmp.eq.s32.totalorder %v796, 0
      %vm861 = vcmp.eq.s32.totalorder %v797, 0
      %vm862 = vcmp.eq.s32.totalorder %v798, 0
      %vm863 = vcmp.eq.s32.totalorder %v799, 0
      %vm864 = vcmp.eq.s32.totalorder %v800, 0
      %vm865 = vcmp.eq.s32.totalorder %v801, 0
      %vm866 = vcmp.eq.s32.totalorder %v802, 0
      %vm867 = vcmp.eq.s32.totalorder %v803, 0
      %vm868 = vcmp.eq.s32.totalorder %v804, 0
      %vm869 = vcmp.eq.s32.totalorder %v805, 0
      %vm870 = vcmp.eq.s32.totalorder %v806, 0
      %vm871 = vcmp.eq.s32.totalorder %v807, 0
      %vm872 = vcmp.eq.s32.totalorder %v808, 0
      %vm873 = vcmp.eq.s32.totalorder %v809, 0
      %vm874 = vcmp.eq.s32.totalorder %v810, 0
      %v875 = vrot.slane %v682, 7
      %v876 = vrot.slane %v683, 7
      %v877 = vrot.slane %v684, 7
      %v878 = vrot.slane %v685, 7
      %v879 = vrot.slane %v686, 7
      %v880 = vrot.slane %v687, 7
      %v881 = vrot.slane %v688, 7
      %v882 = vrot.slane %v689, 7
      %v883 = vrot.slane %v690, 7
      %v884 = vrot.slane %v691, 7
      %v885 = vrot.slane %v692, 7
      %v886 = vrot.slane %v693, 7
      %v887 = vrot.slane %v694, 7
      %v888 = vrot.slane %v695, 7
      %v889 = vrot.slane %v696, 7
      %v890 = vrot.slane %v697, 7
      %v891 = vrot.slane %v698, 7
      %v892 = vrot.slane %v699, 7
      %v893 = vrot.slane %v700, 7
      %v894 = vrot.slane %v701, 7
      %v895 = vrot.slane %v702, 7
      %v896 = vrot.slane %v703, 7
      %v897 = vrot.slane %v704, 7
      %v898 = vrot.slane %v705, 7
      %v899 = vrot.slane %v706, 7
      %v900 = vrot.slane %v707, 7
      %v901 = vrot.slane %v708, 7
      %v902 = vrot.slane %v709, 7
      %v903 = vrot.slane %v710, 7
      %v904 = vrot.slane %v711, 7
      %v905 = vrot.slane %v712, 7
      %v906 = vrot.slane %v713, 7
      %v907 = vrot.slane %v714, 7
      %v908 = vrot.slane %v715, 7
      %v909 = vrot.slane %v716, 7
      %v910 = vrot.slane %v717, 7
      %v911 = vrot.slane %v718, 7
      %v912 = vrot.slane %v719, 7
      %v913 = vrot.slane %v720, 7
      %v914 = vrot.slane %v721, 7
      %v915 = vrot.slane %v722, 7
      %v916 = vrot.slane %v723, 7
      %v917 = vrot.slane %v724, 7
      %v918 = vrot.slane %v725, 7
      %v919 = vrot.slane %v726, 7
      %v920 = vrot.slane %v727, 7
      %v921 = vrot.slane %v728, 7
      %v922 = vrot.slane %v729, 7
      %v923 = vrot.slane %v730, 7
      %v924 = vrot.slane %v731, 7
      %v925 = vrot.slane %v732, 7
      %v926 = vrot.slane %v733, 7
      %v927 = vrot.slane %v734, 7
      %v928 = vrot.slane %v735, 7
      %v929 = vrot.slane %v736, 7
      %v930 = vrot.slane %v737, 7
      %v931 = vrot.slane %v738, 7
      %v932 = vrot.slane %v739, 7
      %v933 = vrot.slane %v740, 7
      %v934 = vrot.slane %v741, 7
      %v935 = vrot.slane %v742, 7
      %v936 = vrot.slane %v743, 7
      %v937 = vrot.slane %v744, 7
      %v938 = vrot.slane %v745, 7
      %vm939 = vcmp.lt.s32.totalorder %v747, 1
      %v940 = vsel %vm939, %v935, %v937
      %v941 = vsel %vm939, %v936, %v938
      %v942 = vsel %vm939, %v933, %v935
      %v943 = vsel %vm939, %v934, %v936
      %v944 = vsel %vm939, %v931, %v933
      %v945 = vsel %vm939, %v932, %v934
      %v946 = vsel %vm939, %v929, %v931
      %v947 = vsel %vm939, %v930, %v932
      %v948 = vsel %vm939, %v927, %v929
      %v949 = vsel %vm939, %v928, %v930
      %v950 = vsel %vm939, %v925, %v927
      %v951 = vsel %vm939, %v926, %v928
      %v952 = vsel %vm939, %v923, %v925
      %v953 = vsel %vm939, %v924, %v926
      %v954 = vsel %vm939, %v921, %v923
      %v955 = vsel %vm939, %v922, %v924
      %v956 = vsel %vm939, %v919, %v921
      %v957 = vsel %vm939, %v920, %v922
      %v958 = vsel %vm939, %v917, %v919
      %v959 = vsel %vm939, %v918, %v920
      %v960 = vsel %vm939, %v915, %v917
      %v961 = vsel %vm939, %v916, %v918
      %v962 = vsel %vm939, %v913, %v915
      %v963 = vsel %vm939, %v914, %v916
      %v964 = vsel %vm939, %v911, %v913
      %v965 = vsel %vm939, %v912, %v914
      %v966 = vsel %vm939, %v909, %v911
      %v967 = vsel %vm939, %v910, %v912
      %v968 = vsel %vm939, %v907, %v909
      %v969 = vsel %vm939, %v908, %v910
      %v970 = vsel %vm939, %v905, %v907
      %v971 = vsel %vm939, %v906, %v908
      %v972 = vsel %vm939, %v903, %v905
      %v973 = vsel %vm939, %v904, %v906
      %v974 = vsel %vm939, %v901, %v903
      %v975 = vsel %vm939, %v902, %v904
      %v976 = vsel %vm939, %v899, %v901
      %v977 = vsel %vm939, %v900, %v902
      %v978 = vsel %vm939, %v897, %v899
      %v979 = vsel %vm939, %v898, %v900
      %v980 = vsel %vm939, %v895, %v897
      %v981 = vsel %vm939, %v896, %v898
      %v982 = vsel %vm939, %v893, %v895
      %v983 = vsel %vm939, %v894, %v896
      %v984 = vsel %vm939, %v891, %v893
      %v985 = vsel %vm939, %v892, %v894
      %v986 = vsel %vm939, %v889, %v891
      %v987 = vsel %vm939, %v890, %v892
      %v988 = vsel %vm939, %v887, %v889
      %v989 = vsel %vm939, %v888, %v890
      %v990 = vsel %vm939, %v885, %v887
      %v991 = vsel %vm939, %v886, %v888
      %v992 = vsel %vm939, %v883, %v885
      %v993 = vsel %vm939, %v884, %v886
      %v994 = vsel %vm939, %v881, %v883
      %v995 = vsel %vm939, %v882, %v884
      %v996 = vsel %vm939, %v879, %v881
      %v997 = vsel %vm939, %v880, %v882
      %v998 = vsel %vm939, %v877, %v879
      %v999 = vsel %vm939, %v878, %v880
      %v1000 = vsel %vm939, %v875, %v877
      %v1001 = vsel %vm939, %v876, %v878
      %v1002 = vsel %vm939, %v937, %v875
      %v1003 = vsel %vm939, %v938, %v876
      %v1004 = vsel %vm843, 0.0, %v1002
      %v1005 = vsel %vm843, 0.0, %v1003
      %v1006 = vsel %vm844, 0.0, %v1000
      %v1007 = vsel %vm844, 0.0, %v1001
      %v1008 = vsel %vm845, 0.0, %v998
      %v1009 = vsel %vm845, 0.0, %v999
      %v1010 = vsel %vm846, 0.0, %v996
      %v1011 = vsel %vm846, 0.0, %v997
      %v1012 = vsel %vm847, 0.0, %v994
      %v1013 = vsel %vm847, 0.0, %v995
      %v1014 = vsel %vm848, 0.0, %v992
      %v1015 = vsel %vm848, 0.0, %v993
      %v1016 = vsel %vm849, 0.0, %v990
      %v1017 = vsel %vm849, 0.0, %v991
      %v1018 = vsel %vm850, 0.0, %v988
      %v1019 = vsel %vm850, 0.0, %v989
      %v1020 = vsel %vm851, 0.0, %v986
      %v1021 = vsel %vm851, 0.0, %v987
      %v1022 = vsel %vm852, 0.0, %v984
      %v1023 = vsel %vm852, 0.0, %v985
      %v1024 = vsel %vm853, 0.0, %v982
      %v1025 = vsel %vm853, 0.0, %v983
      %v1026 = vsel %vm854, 0.0, %v980
      %v1027 = vsel %vm854, 0.0, %v981
      %v1028 = vsel %vm855, 0.0, %v978
      %v1029 = vsel %vm855, 0.0, %v979
      %v1030 = vsel %vm856, 0.0, %v976
      %v1031 = vsel %vm856, 0.0, %v977
      %v1032 = vsel %vm857, 0.0, %v974
      %v1033 = vsel %vm857, 0.0, %v975
      %v1034 = vsel %vm858, 0.0, %v972
      %v1035 = vsel %vm858, 0.0, %v973
      %v1036 = vsel %vm859, 0.0, %v970
      %v1037 = vsel %vm859, 0.0, %v971
      %v1038 = vsel %vm860, 0.0, %v968
      %v1039 = vsel %vm860, 0.0, %v969
      %v1040 = vsel %vm861, 0.0, %v966
      %v1041 = vsel %vm861, 0.0, %v967
      %v1042 = vsel %vm862, 0.0, %v964
      %v1043 = vsel %vm862, 0.0, %v965
      %v1044 = vsel %vm863, 0.0, %v962
      %v1045 = vsel %vm863, 0.0, %v963
      %v1046 = vsel %vm864, 0.0, %v960
      %v1047 = vsel %vm864, 0.0, %v961
      %v1048 = vsel %vm865, 0.0, %v958
      %v1049 = vsel %vm865, 0.0, %v959
      %v1050 = vsel %vm866, 0.0, %v956
      %v1051 = vsel %vm866, 0.0, %v957
      %v1052 = vsel %vm867, 0.0, %v954
      %v1053 = vsel %vm867, 0.0, %v955
      %v1054 = vsel %vm868, 0.0, %v952
      %v1055 = vsel %vm868, 0.0, %v953
      %v1056 = vsel %vm869, 0.0, %v950
      %v1057 = vsel %vm869, 0.0, %v951
      %v1058 = vsel %vm870, 0.0, %v948
      %v1059 = vsel %vm870, 0.0, %v949
      %v1060 = vsel %vm871, 0.0, %v946
      %v1061 = vsel %vm871, 0.0, %v947
      %v1062 = vsel %vm872, 0.0, %v944
      %v1063 = vsel %vm872, 0.0, %v945
      %v1064 = vsel %vm873, 0.0, %v942
      %v1065 = vsel %vm873, 0.0, %v943
      %v1066 = vsel %vm874, 0.0, %v940
      %v1067 = vsel %vm874, 0.0, %v941
      %v1068 = vpack.c.bf16 %v1006, %v1004
      %v1069 = vpack.c.bf16 %v1007, %v1005
      %v1070 = vpack.c.bf16 %v1010, %v1008
      %v1071 = vpack.c.bf16 %v1011, %v1009
      %v1072 = vpack.c.bf16 %v1014, %v1012
      %v1073 = vpack.c.bf16 %v1015, %v1013
      %v1074 = vpack.c.bf16 %v1018, %v1016
      %v1075 = vpack.c.bf16 %v1019, %v1017
      %v1076 = vpack.c.bf16 %v1022, %v1020
      %v1077 = vpack.c.bf16 %v1023, %v1021
      %v1078 = vpack.c.bf16 %v1026, %v1024
      %v1079 = vpack.c.bf16 %v1027, %v1025
      %v1080 = vpack.c.bf16 %v1030, %v1028
      %v1081 = vpack.c.bf16 %v1031, %v1029
      %v1082 = vpack.c.bf16 %v1034, %v1032
      %v1083 = vpack.c.bf16 %v1035, %v1033
      %v1084 = vpack.c.bf16 %v1038, %v1036
      %v1085 = vpack.c.bf16 %v1039, %v1037
      %v1086 = vpack.c.bf16 %v1042, %v1040
      %v1087 = vpack.c.bf16 %v1043, %v1041
      %v1088 = vpack.c.bf16 %v1046, %v1044
      %v1089 = vpack.c.bf16 %v1047, %v1045
      %v1090 = vpack.c.bf16 %v1050, %v1048
      %v1091 = vpack.c.bf16 %v1051, %v1049
      %v1092 = vpack.c.bf16 %v1054, %v1052
      %v1093 = vpack.c.bf16 %v1055, %v1053
      %v1094 = vpack.c.bf16 %v1058, %v1056
      %v1095 = vpack.c.bf16 %v1059, %v1057
      %v1096 = vpack.c.bf16 %v1062, %v1060
      %v1097 = vpack.c.bf16 %v1063, %v1061
      %v1098 = vpack.c.bf16 %v1066, %v1064
      %v1099 = vpack.c.bf16 %v1067, %v1065
      %vm1100 = vcmp.eq.s32.totalorder %v779, 15
      %vm1101 = vcmp.eq.s32.totalorder %v780, 15
      %vm1102 = vcmp.eq.s32.totalorder %v781, 15
      %vm1103 = vcmp.eq.s32.totalorder %v782, 15
      %vm1104 = vcmp.eq.s32.totalorder %v783, 15
      %vm1105 = vcmp.eq.s32.totalorder %v784, 15
      %vm1106 = vcmp.eq.s32.totalorder %v785, 15
      %vm1107 = vcmp.eq.s32.totalorder %v786, 15
      %vm1108 = vcmp.eq.s32.totalorder %v787, 15
      %vm1109 = vcmp.eq.s32.totalorder %v788, 15
      %vm1110 = vcmp.eq.s32.totalorder %v789, 15
      %vm1111 = vcmp.eq.s32.totalorder %v790, 15
      %vm1112 = vcmp.eq.s32.totalorder %v791, 15
      %vm1113 = vcmp.eq.s32.totalorder %v792, 15
      %vm1114 = vcmp.eq.s32.totalorder %v793, 15
      %vm1115 = vcmp.eq.s32.totalorder %v794, 15
      %vm1116 = vcmp.eq.s32.totalorder %v795, 15
      %vm1117 = vcmp.eq.s32.totalorder %v796, 15
      %vm1118 = vcmp.eq.s32.totalorder %v797, 15
      %vm1119 = vcmp.eq.s32.totalorder %v798, 15
      %vm1120 = vcmp.eq.s32.totalorder %v799, 15
      %vm1121 = vcmp.eq.s32.totalorder %v800, 15
      %vm1122 = vcmp.eq.s32.totalorder %v801, 15
      %vm1123 = vcmp.eq.s32.totalorder %v802, 15
      %vm1124 = vcmp.eq.s32.totalorder %v803, 15
      %vm1125 = vcmp.eq.s32.totalorder %v804, 15
      %vm1126 = vcmp.eq.s32.totalorder %v805, 15
      %vm1127 = vcmp.eq.s32.totalorder %v806, 15
      %vm1128 = vcmp.eq.s32.totalorder %v807, 15
      %vm1129 = vcmp.eq.s32.totalorder %v808, 15
      %vm1130 = vcmp.eq.s32.totalorder %v809, 15
      %vm1131 = vcmp.eq.s32.totalorder %v810, 15
      %v1132 = vrot.slane %v682, 1
      %v1133 = vrot.slane %v683, 1
      %v1134 = vrot.slane %v684, 1
      %v1135 = vrot.slane %v685, 1
      %v1136 = vrot.slane %v686, 1
      %v1137 = vrot.slane %v687, 1
      %v1138 = vrot.slane %v688, 1
      %v1139 = vrot.slane %v689, 1
      %v1140 = vrot.slane %v690, 1
      %v1141 = vrot.slane %v691, 1
      %v1142 = vrot.slane %v692, 1
      %v1143 = vrot.slane %v693, 1
      %v1144 = vrot.slane %v694, 1
      %v1145 = vrot.slane %v695, 1
      %v1146 = vrot.slane %v696, 1
      %v1147 = vrot.slane %v697, 1
      %v1148 = vrot.slane %v698, 1
      %v1149 = vrot.slane %v699, 1
      %v1150 = vrot.slane %v700, 1
      %v1151 = vrot.slane %v701, 1
      %v1152 = vrot.slane %v702, 1
      %v1153 = vrot.slane %v703, 1
      %v1154 = vrot.slane %v704, 1
      %v1155 = vrot.slane %v705, 1
      %v1156 = vrot.slane %v706, 1
      %v1157 = vrot.slane %v707, 1
      %v1158 = vrot.slane %v708, 1
      %v1159 = vrot.slane %v709, 1
      %v1160 = vrot.slane %v710, 1
      %v1161 = vrot.slane %v711, 1
      %v1162 = vrot.slane %v712, 1
      %v1163 = vrot.slane %v713, 1
      %v1164 = vrot.slane %v714, 1
      %v1165 = vrot.slane %v715, 1
      %v1166 = vrot.slane %v716, 1
      %v1167 = vrot.slane %v717, 1
      %v1168 = vrot.slane %v718, 1
      %v1169 = vrot.slane %v719, 1
      %v1170 = vrot.slane %v720, 1
      %v1171 = vrot.slane %v721, 1
      %v1172 = vrot.slane %v722, 1
      %v1173 = vrot.slane %v723, 1
      %v1174 = vrot.slane %v724, 1
      %v1175 = vrot.slane %v725, 1
      %v1176 = vrot.slane %v726, 1
      %v1177 = vrot.slane %v727, 1
      %v1178 = vrot.slane %v728, 1
      %v1179 = vrot.slane %v729, 1
      %v1180 = vrot.slane %v730, 1
      %v1181 = vrot.slane %v731, 1
      %v1182 = vrot.slane %v732, 1
      %v1183 = vrot.slane %v733, 1
      %v1184 = vrot.slane %v734, 1
      %v1185 = vrot.slane %v735, 1
      %v1186 = vrot.slane %v736, 1
      %v1187 = vrot.slane %v737, 1
      %v1188 = vrot.slane %v738, 1
      %v1189 = vrot.slane %v739, 1
      %v1190 = vrot.slane %v740, 1
      %v1191 = vrot.slane %v741, 1
      %v1192 = vrot.slane %v742, 1
      %v1193 = vrot.slane %v743, 1
      %v1194 = vrot.slane %v744, 1
      %v1195 = vrot.slane %v745, 1
      %vm1196 = vcmp.lt.s32.totalorder %v747, 7
      %v1197 = vsel %vm1196, %v1192, %v1194
      %v1198 = vsel %vm1196, %v1193, %v1195
      %v1199 = vsel %vm1196, %v1190, %v1192
      %v1200 = vsel %vm1196, %v1191, %v1193
      %v1201 = vsel %vm1196, %v1188, %v1190
      %v1202 = vsel %vm1196, %v1189, %v1191
      %v1203 = vsel %vm1196, %v1186, %v1188
      %v1204 = vsel %vm1196, %v1187, %v1189
      %v1205 = vsel %vm1196, %v1184, %v1186
      %v1206 = vsel %vm1196, %v1185, %v1187
      %v1207 = vsel %vm1196, %v1182, %v1184
      %v1208 = vsel %vm1196, %v1183, %v1185
      %v1209 = vsel %vm1196, %v1180, %v1182
      %v1210 = vsel %vm1196, %v1181, %v1183
      %v1211 = vsel %vm1196, %v1178, %v1180
      %v1212 = vsel %vm1196, %v1179, %v1181
      %v1213 = vsel %vm1196, %v1176, %v1178
      %v1214 = vsel %vm1196, %v1177, %v1179
      %v1215 = vsel %vm1196, %v1174, %v1176
      %v1216 = vsel %vm1196, %v1175, %v1177
      %v1217 = vsel %vm1196, %v1172, %v1174
      %v1218 = vsel %vm1196, %v1173, %v1175
      %v1219 = vsel %vm1196, %v1170, %v1172
      %v1220 = vsel %vm1196, %v1171, %v1173
      %v1221 = vsel %vm1196, %v1168, %v1170
      %v1222 = vsel %vm1196, %v1169, %v1171
      %v1223 = vsel %vm1196, %v1166, %v1168
      %v1224 = vsel %vm1196, %v1167, %v1169
      %v1225 = vsel %vm1196, %v1164, %v1166
      %v1226 = vsel %vm1196, %v1165, %v1167
      %v1227 = vsel %vm1196, %v1162, %v1164
      %v1228 = vsel %vm1196, %v1163, %v1165
      %v1229 = vsel %vm1196, %v1160, %v1162
      %v1230 = vsel %vm1196, %v1161, %v1163
      %v1231 = vsel %vm1196, %v1158, %v1160
      %v1232 = vsel %vm1196, %v1159, %v1161
      %v1233 = vsel %vm1196, %v1156, %v1158
      %v1234 = vsel %vm1196, %v1157, %v1159
      %v1235 = vsel %vm1196, %v1154, %v1156
      %v1236 = vsel %vm1196, %v1155, %v1157
      %v1237 = vsel %vm1196, %v1152, %v1154
      %v1238 = vsel %vm1196, %v1153, %v1155
      %v1239 = vsel %vm1196, %v1150, %v1152
      %v1240 = vsel %vm1196, %v1151, %v1153
      %v1241 = vsel %vm1196, %v1148, %v1150
      %v1242 = vsel %vm1196, %v1149, %v1151
      %v1243 = vsel %vm1196, %v1146, %v1148
      %v1244 = vsel %vm1196, %v1147, %v1149
      %v1245 = vsel %vm1196, %v1144, %v1146
      %v1246 = vsel %vm1196, %v1145, %v1147
      %v1247 = vsel %vm1196, %v1142, %v1144
      %v1248 = vsel %vm1196, %v1143, %v1145
      %v1249 = vsel %vm1196, %v1140, %v1142
      %v1250 = vsel %vm1196, %v1141, %v1143
      %v1251 = vsel %vm1196, %v1138, %v1140
      %v1252 = vsel %vm1196, %v1139, %v1141
      %v1253 = vsel %vm1196, %v1136, %v1138
      %v1254 = vsel %vm1196, %v1137, %v1139
      %v1255 = vsel %vm1196, %v1134, %v1136
      %v1256 = vsel %vm1196, %v1135, %v1137
      %v1257 = vsel %vm1196, %v1132, %v1134
      %v1258 = vsel %vm1196, %v1133, %v1135
      %v1259 = vsel %vm1196, %v1194, %v1132
      %v1260 = vsel %vm1196, %v1195, %v1133
      %v1261 = vsel %vm1100, 0.0, %v1257
      %v1262 = vsel %vm1100, 0.0, %v1258
      %v1263 = vsel %vm1101, 0.0, %v1255
      %v1264 = vsel %vm1101, 0.0, %v1256
      %v1265 = vsel %vm1102, 0.0, %v1253
      %v1266 = vsel %vm1102, 0.0, %v1254
      %v1267 = vsel %vm1103, 0.0, %v1251
      %v1268 = vsel %vm1103, 0.0, %v1252
      %v1269 = vsel %vm1104, 0.0, %v1249
      %v1270 = vsel %vm1104, 0.0, %v1250
      %v1271 = vsel %vm1105, 0.0, %v1247
      %v1272 = vsel %vm1105, 0.0, %v1248
      %v1273 = vsel %vm1106, 0.0, %v1245
      %v1274 = vsel %vm1106, 0.0, %v1246
      %v1275 = vsel %vm1107, 0.0, %v1243
      %v1276 = vsel %vm1107, 0.0, %v1244
      %v1277 = vsel %vm1108, 0.0, %v1241
      %v1278 = vsel %vm1108, 0.0, %v1242
      %v1279 = vsel %vm1109, 0.0, %v1239
      %v1280 = vsel %vm1109, 0.0, %v1240
      %v1281 = vsel %vm1110, 0.0, %v1237
      %v1282 = vsel %vm1110, 0.0, %v1238
      %v1283 = vsel %vm1111, 0.0, %v1235
      %v1284 = vsel %vm1111, 0.0, %v1236
      %v1285 = vsel %vm1112, 0.0, %v1233
      %v1286 = vsel %vm1112, 0.0, %v1234
      %v1287 = vsel %vm1113, 0.0, %v1231
      %v1288 = vsel %vm1113, 0.0, %v1232
      %v1289 = vsel %vm1114, 0.0, %v1229
      %v1290 = vsel %vm1114, 0.0, %v1230
      %v1291 = vsel %vm1115, 0.0, %v1227
      %v1292 = vsel %vm1115, 0.0, %v1228
      %v1293 = vsel %vm1116, 0.0, %v1225
      %v1294 = vsel %vm1116, 0.0, %v1226
      %v1295 = vsel %vm1117, 0.0, %v1223
      %v1296 = vsel %vm1117, 0.0, %v1224
      %v1297 = vsel %vm1118, 0.0, %v1221
      %v1298 = vsel %vm1118, 0.0, %v1222
      %v1299 = vsel %vm1119, 0.0, %v1219
      %v1300 = vsel %vm1119, 0.0, %v1220
      %v1301 = vsel %vm1120, 0.0, %v1217
      %v1302 = vsel %vm1120, 0.0, %v1218
      %v1303 = vsel %vm1121, 0.0, %v1215
      %v1304 = vsel %vm1121, 0.0, %v1216
      %v1305 = vsel %vm1122, 0.0, %v1213
      %v1306 = vsel %vm1122, 0.0, %v1214
      %v1307 = vsel %vm1123, 0.0, %v1211
      %v1308 = vsel %vm1123, 0.0, %v1212
      %v1309 = vsel %vm1124, 0.0, %v1209
      %v1310 = vsel %vm1124, 0.0, %v1210
      %v1311 = vsel %vm1125, 0.0, %v1207
      %v1312 = vsel %vm1125, 0.0, %v1208
      %v1313 = vsel %vm1126, 0.0, %v1205
      %v1314 = vsel %vm1126, 0.0, %v1206
      %v1315 = vsel %vm1127, 0.0, %v1203
      %v1316 = vsel %vm1127, 0.0, %v1204
      %v1317 = vsel %vm1128, 0.0, %v1201
      %v1318 = vsel %vm1128, 0.0, %v1202
      %v1319 = vsel %vm1129, 0.0, %v1199
      %v1320 = vsel %vm1129, 0.0, %v1200
      %v1321 = vsel %vm1130, 0.0, %v1197
      %v1322 = vsel %vm1130, 0.0, %v1198
      %v1323 = vsel %vm1131, 0.0, %v1259
      %v1324 = vsel %vm1131, 0.0, %v1260
      %v1325 = vpack.c.bf16 %v1263, %v1261
      %v1326 = vpack.c.bf16 %v1264, %v1262
      %v1327 = vpack.c.bf16 %v1267, %v1265
      %v1328 = vpack.c.bf16 %v1268, %v1266
      %v1329 = vpack.c.bf16 %v1271, %v1269
      %v1330 = vpack.c.bf16 %v1272, %v1270
      %v1331 = vpack.c.bf16 %v1275, %v1273
      %v1332 = vpack.c.bf16 %v1276, %v1274
      %v1333 = vpack.c.bf16 %v1279, %v1277
      %v1334 = vpack.c.bf16 %v1280, %v1278
      %v1335 = vpack.c.bf16 %v1283, %v1281
      %v1336 = vpack.c.bf16 %v1284, %v1282
      %v1337 = vpack.c.bf16 %v1287, %v1285
      %v1338 = vpack.c.bf16 %v1288, %v1286
      %v1339 = vpack.c.bf16 %v1291, %v1289
      %v1340 = vpack.c.bf16 %v1292, %v1290
      %v1341 = vpack.c.bf16 %v1295, %v1293
      %v1342 = vpack.c.bf16 %v1296, %v1294
      %v1343 = vpack.c.bf16 %v1299, %v1297
      %v1344 = vpack.c.bf16 %v1300, %v1298
      %v1345 = vpack.c.bf16 %v1303, %v1301
      %v1346 = vpack.c.bf16 %v1304, %v1302
      %v1347 = vpack.c.bf16 %v1307, %v1305
      %v1348 = vpack.c.bf16 %v1308, %v1306
      %v1349 = vpack.c.bf16 %v1311, %v1309
      %v1350 = vpack.c.bf16 %v1312, %v1310
      %v1351 = vpack.c.bf16 %v1315, %v1313
      %v1352 = vpack.c.bf16 %v1316, %v1314
      %v1353 = vpack.c.bf16 %v1319, %v1317
      %v1354 = vpack.c.bf16 %v1320, %v1318
      %v1355 = vpack.c.bf16 %v1323, %v1321
      %v1356 = vpack.c.bf16 %v1324, %v1322
      %v1357 = vld [vmem:[%s5] sm:$0xf]
      %v1358 = vld [vmem:[%s5 + $0x4] sm:$0xf]
      %v1359 = vld [vmem:[%s5 + $0x8] sm:$0xf]
      %v1360 = vld [vmem:[%s5 + $0xc] sm:$0xf]
      %v1361 = vld [vmem:[%s5 + $0x10] sm:$0xf]
      %v1362 = vld [vmem:[%s5 + $0x14] sm:$0xf]
      %v1363 = vld [vmem:[%s5 + $0x18] sm:$0xf]
      %v1364 = vld [vmem:[%s5 + $0x1c] sm:$0xf]
      %v1365 = vld [vmem:[%s5 + $0x20] sm:$0xf]
      %v1366 = vld [vmem:[%s5 + $0x24] sm:$0xf]
      %v1367 = vld [vmem:[%s5 + $0x28] sm:$0xf]
      %v1368 = vld [vmem:[%s5 + $0x2c] sm:$0xf]
      %v1369 = vld [vmem:[%s5 + $0x30] sm:$0xf]
      %v1370 = vld [vmem:[%s5 + $0x34] sm:$0xf]
      %v1371 = vld [vmem:[%s5 + $0x38] sm:$0xf]
      %v1372 = vld [vmem:[%s5 + $0x3c] sm:$0xf]
      %v1373 = vld [vmem:[%s5 + $0x40] sm:$0xf]
      %v1374 = vld [vmem:[%s5 + $0x44] sm:$0xf]
      %v1375 = vld [vmem:[%s5 + $0x48] sm:$0xf]
      %v1376 = vld [vmem:[%s5 + $0x4c] sm:$0xf]
      %v1377 = vld [vmem:[%s5 + $0x50] sm:$0xf]
      %v1378 = vld [vmem:[%s5 + $0x54] sm:$0xf]
      %v1379 = vld [vmem:[%s5 + $0x58] sm:$0xf]
      %v1380 = vld [vmem:[%s5 + $0x5c] sm:$0xf]
      %v1381 = vld [vmem:[%s5 + $0x60] sm:$0xf]
      %v1382 = vld [vmem:[%s5 + $0x64] sm:$0xf]
      %v1383 = vld [vmem:[%s5 + $0x68] sm:$0xf]
      %v1384 = vld [vmem:[%s5 + $0x6c] sm:$0xf]
      %v1385 = vld [vmem:[%s5 + $0x70] sm:$0xf]
      %v1386 = vld [vmem:[%s5 + $0x74] sm:$0xf]
      %v1387 = vld [vmem:[%s5 + $0x78] sm:$0xf]
      %v1388 = vld [vmem:[%s5 + $0x7c] sm:$0xf]
      %s1389 = scalar_lea.vmem %s5, 128
      %v1390 = vld [vmem:[%s1389] sm:$0xf]
      %v1391 = vld [vmem:[%s1389 + $0x4] sm:$0xf]
      %v1392 = vld [vmem:[%s1389 + $0x8] sm:$0xf]
      %v1393 = vld [vmem:[%s1389 + $0xc] sm:$0xf]
      %v1394 = vld [vmem:[%s1389 + $0x10] sm:$0xf]
      %v1395 = vld [vmem:[%s1389 + $0x14] sm:$0xf]
      %v1396 = vld [vmem:[%s1389 + $0x18] sm:$0xf]
      %v1397 = vld [vmem:[%s1389 + $0x1c] sm:$0xf]
      %v1398 = vld [vmem:[%s1389 + $0x20] sm:$0xf]
      %v1399 = vld [vmem:[%s1389 + $0x24] sm:$0xf]
      %v1400 = vld [vmem:[%s1389 + $0x28] sm:$0xf]
      %v1401 = vld [vmem:[%s1389 + $0x2c] sm:$0xf]
      %v1402 = vld [vmem:[%s1389 + $0x30] sm:$0xf]
      %v1403 = vld [vmem:[%s1389 + $0x34] sm:$0xf]
      %v1404 = vld [vmem:[%s1389 + $0x38] sm:$0xf]
      %v1405 = vld [vmem:[%s1389 + $0x3c] sm:$0xf]
      %v1406 = vld [vmem:[%s1389 + $0x40] sm:$0xf]
      %v1407 = vld [vmem:[%s1389 + $0x44] sm:$0xf]
      %v1408 = vld [vmem:[%s1389 + $0x48] sm:$0xf]
      %v1409 = vld [vmem:[%s1389 + $0x4c] sm:$0xf]
      %v1410 = vld [vmem:[%s1389 + $0x50] sm:$0xf]
      %v1411 = vld [vmem:[%s1389 + $0x54] sm:$0xf]
      %v1412 = vld [vmem:[%s1389 + $0x58] sm:$0xf]
      %v1413 = vld [vmem:[%s1389 + $0x5c] sm:$0xf]
      %v1414 = vld [vmem:[%s1389 + $0x60] sm:$0xf]
      %v1415 = vld [vmem:[%s1389 + $0x64] sm:$0xf]
      %v1416 = vld [vmem:[%s1389 + $0x68] sm:$0xf]
      %v1417 = vld [vmem:[%s1389 + $0x6c] sm:$0xf]
      %v1418 = vld [vmem:[%s1389 + $0x70] sm:$0xf]
      %v1419 = vld [vmem:[%s1389 + $0x74] sm:$0xf]
      %v1420 = vld [vmem:[%s1389 + $0x78] sm:$0xf]
      %v1421 = vld [vmem:[%s1389 + $0x7c] sm:$0xf]
      %v1454 = vunpack.c.l.b16 %v1390
      %v1455 = vunpack.c.l.b16 %v1391
      %v1456 = vunpack.c.l.b16 %v1392
      %v1457 = vunpack.c.l.b16 %v1393
      %v1458 = vunpack.c.l.b16 %v1394
      %v1459 = vunpack.c.l.b16 %v1395
      %v1460 = vunpack.c.l.b16 %v1396
      %v1461 = vunpack.c.l.b16 %v1397
      %v1462 = vunpack.c.l.b16 %v1398
      %v1463 = vunpack.c.l.b16 %v1399
      %v1464 = vunpack.c.l.b16 %v1400
      %v1465 = vunpack.c.l.b16 %v1401
      %v1466 = vunpack.c.l.b16 %v1402
      %v1467 = vunpack.c.l.b16 %v1403
      %v1468 = vunpack.c.l.b16 %v1404
      %v1469 = vunpack.c.l.b16 %v1405
      %v1470 = vunpack.c.l.b16 %v1406
      %v1471 = vunpack.c.l.b16 %v1407
      %v1472 = vunpack.c.l.b16 %v1408
      %v1473 = vunpack.c.l.b16 %v1409
      %v1474 = vunpack.c.l.b16 %v1410
      %v1475 = vunpack.c.l.b16 %v1411
      %v1476 = vunpack.c.l.b16 %v1412
      %v1477 = vunpack.c.l.b16 %v1413
      %v1478 = vunpack.c.l.b16 %v1414
      %v1479 = vunpack.c.l.b16 %v1415
      %v1480 = vunpack.c.l.b16 %v1416
      %v1481 = vunpack.c.l.b16 %v1417
      %v1482 = vunpack.c.l.b16 %v1418
      %v1483 = vunpack.c.l.b16 %v1419
      %v1484 = vunpack.c.l.b16 %v1420
      %v1485 = vunpack.c.l.b16 %v1421
      %v1486 = vpack.c.b16 %v1455, %v1454
      %v1487 = vpack.c.b16 %v1457, %v1456
      %v1488 = vpack.c.b16 %v1459, %v1458
      %v1489 = vpack.c.b16 %v1461, %v1460
      %v1490 = vpack.c.b16 %v1463, %v1462
      %v1491 = vpack.c.b16 %v1465, %v1464
      %v1492 = vpack.c.b16 %v1467, %v1466
      %v1493 = vpack.c.b16 %v1469, %v1468
      %v1494 = vpack.c.b16 %v1471, %v1470
      %v1495 = vpack.c.b16 %v1473, %v1472
      %v1496 = vpack.c.b16 %v1475, %v1474
      %v1497 = vpack.c.b16 %v1477, %v1476
      %v1498 = vpack.c.b16 %v1479, %v1478
      %v1499 = vpack.c.b16 %v1481, %v1480
      %v1500 = vpack.c.b16 %v1483, %v1482
      %v1501 = vpack.c.b16 %v1485, %v1484
      %1518 = vmatprep.subr.bf16.mxu0 0
      %1519 = vmatpush1.bf16.msra.mxu0 %v1486
      %1520 = vmatprep.subr.bf16.mxu0 0
      %1521 = vmatpush1.bf16.msra.mxu0 %v1487
      %1522 = vmatprep.subr.bf16.mxu0 0
      %1523 = vmatpush1.bf16.msra.mxu0 %v1488
      %1524 = vmatprep.subr.bf16.mxu0 0
      %1525 = vmatpush1.bf16.msra.mxu0 %v1489
      %1526 = vmatprep.subr.bf16.mxu0 0
      %1527 = vmatpush1.bf16.msra.mxu0 %v1490
      %1528 = vmatprep.subr.bf16.mxu0 0
      %1529 = vmatpush1.bf16.msra.mxu0 %v1491
      %1530 = vmatprep.subr.bf16.mxu0 0
      %1531 = vmatpush1.bf16.msra.mxu0 %v1492
      %1532 = vmatprep.subr.bf16.mxu0 0
      %1533 = vmatpush1.bf16.msra.mxu0 %v1493
      %1534 = vmatprep.subr.bf16.mxu0 0
      %1535 = vmatpush1.bf16.msra.mxu0 %v1494
      %1536 = vmatprep.subr.bf16.mxu0 0
      %1537 = vmatpush1.bf16.msra.mxu0 %v1495
      %1538 = vmatprep.subr.bf16.mxu0 0
      %1539 = vmatpush1.bf16.msra.mxu0 %v1496
      %1540 = vmatprep.subr.bf16.mxu0 0
      %1541 = vmatpush1.bf16.msra.mxu0 %v1497
      %1542 = vmatprep.subr.bf16.mxu0 0
      %1543 = vmatpush1.bf16.msra.mxu0 %v1498
      %1544 = vmatprep.subr.bf16.mxu0 0
      %1545 = vmatpush1.bf16.msra.mxu0 %v1499
      %1546 = vmatprep.subr.bf16.mxu0 0
      %1547 = vmatpush1.bf16.msra.mxu0 %v1500
      %1548 = vmatprep.subr.bf16.mxu0 0
      %1549 = vmatpush1.bf16.msra.mxu0 %v1501
      %1550 = vmatprep.mubr.bf16.mxu0 %v812
      %1551 = vmatmul.mubr.bf16.gmra.mrb[0].mxu0 %v811
      %v1552 = vpop.f32.mrb[0].mxu0
      %v1553 = vadd.f32 0.0, %v1552
      %v1554 = vpop.f32.mrb[0].mxu0
      %v1555 = vpop.f32.mrb[0].mxu0
      %v1556 = vadd.f32 0.0, %v1555
      %v1557 = vpop.f32.mrb[0].mxu0
      %1558 = vmatprep.mubr.bf16.mxu0 %v814
      %1559 = vmatmul.mubr.bf16.gmra.mrb[0].mxu0 %v813
      %v1560 = vpop.f32.mrb[0].mxu0
      %v1561 = vadd.f32 0.0, %v1560
      %v1562 = vpop.f32.mrb[0].mxu0
      %v1563 = vpop.f32.mrb[0].mxu0
      %v1564 = vadd.f32 0.0, %v1563
      %v1565 = vpop.f32.mrb[0].mxu0
      %1566 = vmatprep.mubr.bf16.mxu0 %v816
      %1567 = vmatmul.mubr.bf16.gmra.mrb[0].mxu0 %v815
      %v1568 = vpop.f32.mrb[0].mxu0
      %v1569 = vadd.f32 0.0, %v1568
      %v1570 = vpop.f32.mrb[0].mxu0
      %v1571 = vpop.f32.mrb[0].mxu0
      %v1572 = vadd.f32 0.0, %v1571
      %v1573 = vpop.f32.mrb[0].mxu0
      %1574 = vmatprep.mubr.bf16.mxu0 %v818
      %1575 = vmatmul.mubr.bf16.gmra.mrb[0].mxu0 %v817
      %v1576 = vpop.f32.mrb[0].mxu0
      %v1577 = vadd.f32 0.0, %v1576
      %v1578 = vpop.f32.mrb[0].mxu0
      %v1579 = vpop.f32.mrb[0].mxu0
      %v1580 = vadd.f32 0.0, %v1579
      %v1581 = vpop.f32.mrb[0].mxu0
      %1582 = vmatprep.mubr.bf16.mxu0 %v820
      %1583 = vmatmul.mubr.bf16.gmra.mrb[0].mxu0 %v819
      %v1584 = vpop.f32.mrb[0].mxu0
      %v1585 = vadd.f32 0.0, %v1584
      %v1586 = vpop.f32.mrb[0].mxu0
      %v1587 = vpop.f32.mrb[0].mxu0
      %v1588 = vadd.f32 0.0, %v1587
      %v1589 = vpop.f32.mrb[0].mxu0
      %1590 = vmatprep.mubr.bf16.mxu0 %v822
      %1591 = vmatmul.mubr.bf16.gmra.mrb[0].mxu0 %v821
      %v1592 = vpop.f32.mrb[0].mxu0
      %v1593 = vadd.f32 0.0, %v1592
      %v1594 = vpop.f32.mrb[0].mxu0
      %v1595 = vpop.f32.mrb[0].mxu0
      %v1596 = vadd.f32 0.0, %v1595
      %v1597 = vpop.f32.mrb[0].mxu0
      %1598 = vmatprep.mubr.bf16.mxu0 %v824
      %1599 = vmatmul.mubr.bf16.gmra.mrb[0].mxu0 %v823
      %v1600 = vpop.f32.mrb[0].mxu0
      %v1601 = vadd.f32 0.0, %v1600
      %v1602 = vpop.f32.mrb[0].mxu0
      %v1603 = vpop.f32.mrb[0].mxu0
      %v1604 = vadd.f32 0.0, %v1603
      %v1605 = vpop.f32.mrb[0].mxu0
      %1606 = vmatprep.mubr.bf16.mxu0 %v826
      %1607 = vmatmul.mubr.bf16.gmra.mrb[0].mxu0 %v825
      %v1608 = vpop.f32.mrb[0].mxu0
      %v1609 = vadd.f32 0.0, %v1608
      %v1610 = vpop.f32.mrb[0].mxu0
      %v1611 = vpop.f32.mrb[0].mxu0
      %v1612 = vadd.f32 0.0, %v1611
      %v1613 = vpop.f32.mrb[0].mxu0
      %1614 = vmatprep.mubr.bf16.mxu0 %v828
      %1615 = vmatmul.mubr.bf16.gmra.mrb[0].mxu0 %v827
      %v1616 = vpop.f32.mrb[0].mxu0
      %v1617 = vadd.f32 0.0, %v1616
      %v1618 = vpop.f32.mrb[0].mxu0
      %v1619 = vpop.f32.mrb[0].mxu0
      %v1620 = vadd.f32 0.0, %v1619
      %v1621 = vpop.f32.mrb[0].mxu0
      %1622 = vmatprep.mubr.bf16.mxu0 %v830
      %1623 = vmatmul.mubr.bf16.gmra.mrb[0].mxu0 %v829
      %v1624 = vpop.f32.mrb[0].mxu0
      %v1625 = vadd.f32 0.0, %v1624
      %v1626 = vpop.f32.mrb[0].mxu0
      %v1627 = vpop.f32.mrb[0].mxu0
      %v1628 = vadd.f32 0.0, %v1627
      %v1629 = vpop.f32.mrb[0].mxu0
      %1630 = vmatprep.mubr.bf16.mxu0 %v832
      %1631 = vmatmul.mubr.bf16.gmra.mrb[0].mxu0 %v831
      %v1632 = vpop.f32.mrb[0].mxu0
      %v1633 = vadd.f32 0.0, %v1632
      %v1634 = vpop.f32.mrb[0].mxu0
      %v1635 = vpop.f32.mrb[0].mxu0
      %v1636 = vadd.f32 0.0, %v1635
      %v1637 = vpop.f32.mrb[0].mxu0
      %1638 = vmatprep.mubr.bf16.mxu0 %v834
      %1639 = vmatmul.mubr.bf16.gmra.mrb[0].mxu0 %v833
      %v1640 = vpop.f32.mrb[0].mxu0
      %v1641 = vadd.f32 0.0, %v1640
      %v1642 = vpop.f32.mrb[0].mxu0
      %v1643 = vpop.f32.mrb[0].mxu0
      %v1644 = vadd.f32 0.0, %v1643
      %v1645 = vpop.f32.mrb[0].mxu0
      %1646 = vmatprep.mubr.bf16.mxu0 %v836
      %1647 = vmatmul.mubr.bf16.gmra.mrb[0].mxu0 %v835
      %v1648 = vpop.f32.mrb[0].mxu0
      %v1649 = vadd.f32 0.0, %v1648
      %v1650 = vpop.f32.mrb[0].mxu0
      %v1651 = vpop.f32.mrb[0].mxu0
      %v1652 = vadd.f32 0.0, %v1651
      %v1653 = vpop.f32.mrb[0].mxu0
      %1654 = vmatprep.mubr.bf16.mxu0 %v838
      %1655 = vmatmul.mubr.bf16.gmra.mrb[0].mxu0 %v837
      %v1656 = vpop.f32.mrb[0].mxu0
      %v1657 = vadd.f32 0.0, %v1656
      %v1658 = vpop.f32.mrb[0].mxu0
      %v1659 = vpop.f32.mrb[0].mxu0
      %v1660 = vadd.f32 0.0, %v1659
      %v1661 = vpop.f32.mrb[0].mxu0
      %1662 = vmatprep.mubr.bf16.mxu0 %v840
      %1663 = vmatmul.mubr.bf16.gmra.mrb[0].mxu0 %v839
      %v1664 = vpop.f32.mrb[0].mxu0
      %v1665 = vadd.f32 0.0, %v1664
      %v1666 = vpop.f32.mrb[0].mxu0
      %v1667 = vpop.f32.mrb[0].mxu0
      %v1668 = vadd.f32 0.0, %v1667
      %v1669 = vpop.f32.mrb[0].mxu0
      %1670 = vmatprep.mubr.bf16.mxu0 %v842
      %1671 = vmatmul.mubr.bf16.gmra.mrb[0].mxu0 %v841
      %v1672 = vpop.f32.mrb[0].mxu0
      %v1673 = vadd.f32 0.0, %v1672
      %v1674 = vpop.f32.mrb[0].mxu0
      %v1675 = vpop.f32.mrb[0].mxu0
      %v1676 = vadd.f32 0.0, %v1675
      %v1677 = vpop.f32.mrb[0].mxu0
      %1678 = vdwg.mxu0
      %v1711 = vunpack.c.l.b16 %v1357
      %v1712 = vunpack.c.l.b16 %v1358
      %v1713 = vunpack.c.l.b16 %v1359
      %v1714 = vunpack.c.l.b16 %v1360
      %v1715 = vunpack.c.l.b16 %v1361
      %v1716 = vunpack.c.l.b16 %v1362
      %v1717 = vunpack.c.l.b16 %v1363
      %v1718 = vunpack.c.l.b16 %v1364
      %v1719 = vunpack.c.l.b16 %v1365
      %v1720 = vunpack.c.l.b16 %v1366
      %v1721 = vunpack.c.l.b16 %v1367
      %v1722 = vunpack.c.l.b16 %v1368
      %v1723 = vunpack.c.l.b16 %v1369
      %v1724 = vunpack.c.l.b16 %v1370
      %v1725 = vunpack.c.l.b16 %v1371
      %v1726 = vunpack.c.l.b16 %v1372
      %v1727 = vunpack.c.l.b16 %v1373
      %v1728 = vunpack.c.l.b16 %v1374
      %v1729 = vunpack.c.l.b16 %v1375
      %v1730 = vunpack.c.l.b16 %v1376
      %v1731 = vunpack.c.l.b16 %v1377
      %v1732 = vunpack.c.l.b16 %v1378
      %v1733 = vunpack.c.l.b16 %v1379
      %v1734 = vunpack.c.l.b16 %v1380
      %v1735 = vunpack.c.l.b16 %v1381
      %v1736 = vunpack.c.l.b16 %v1382
      %v1737 = vunpack.c.l.b16 %v1383
      %v1738 = vunpack.c.l.b16 %v1384
      %v1739 = vunpack.c.l.b16 %v1385
      %v1740 = vunpack.c.l.b16 %v1386
      %v1741 = vunpack.c.l.b16 %v1387
      %v1742 = vunpack.c.l.b16 %v1388
      %v1743 = vpack.c.b16 %v1712, %v1711
      %v1744 = vpack.c.b16 %v1714, %v1713
      %v1745 = vpack.c.b16 %v1716, %v1715
      %v1746 = vpack.c.b16 %v1718, %v1717
      %v1747 = vpack.c.b16 %v1720, %v1719
      %v1748 = vpack.c.b16 %v1722, %v1721
      %v1749 = vpack.c.b16 %v1724, %v1723
      %v1750 = vpack.c.b16 %v1726, %v1725
      %v1751 = vpack.c.b16 %v1728, %v1727
      %v1752 = vpack.c.b16 %v1730, %v1729
      %v1753 = vpack.c.b16 %v1732, %v1731
      %v1754 = vpack.c.b16 %v1734, %v1733
      %v1755 = vpack.c.b16 %v1736, %v1735
      %v1756 = vpack.c.b16 %v1738, %v1737
      %v1757 = vpack.c.b16 %v1740, %v1739
      %v1758 = vpack.c.b16 %v1742, %v1741
      %1775 = vmatprep.subr.bf16.mxu0 0
      %1776 = vmatpush1.bf16.msra.mxu0 %v1743
      %1777 = vmatprep.subr.bf16.mxu0 0
      %1778 = vmatpush1.bf16.msra.mxu0 %v1744
      %1779 = vmatprep.subr.bf16.mxu0 0
      %1780 = vmatpush1.bf16.msra.mxu0 %v1745
      %1781 = vmatprep.subr.bf16.mxu0 0
      %1782 = vmatpush1.bf16.msra.mxu0 %v1746
      %1783 = vmatprep.subr.bf16.mxu0 0
      %1784 = vmatpush1.bf16.msra.mxu0 %v1747
      %1785 = vmatprep.subr.bf16.mxu0 0
      %1786 = vmatpush1.bf16.msra.mxu0 %v1748
      %1787 = vmatprep.subr.bf16.mxu0 0
      %1788 = vmatpush1.bf16.msra.mxu0 %v1749
      %1789 = vmatprep.subr.bf16.mxu0 0
      %1790 = vmatpush1.bf16.msra.mxu0 %v1750
      %1791 = vmatprep.subr.bf16.mxu0 0
      %1792 = vmatpush1.bf16.msra.mxu0 %v1751
      %1793 = vmatprep.subr.bf16.mxu0 0
      %1794 = vmatpush1.bf16.msra.mxu0 %v1752
      %1795 = vmatprep.subr.bf16.mxu0 0
      %1796 = vmatpush1.bf16.msra.mxu0 %v1753
      %1797 = vmatprep.subr.bf16.mxu0 0
      %1798 = vmatpush1.bf16.msra.mxu0 %v1754
      %1799 = vmatprep.subr.bf16.mxu0 0
      %1800 = vmatpush1.bf16.msra.mxu0 %v1755
      %1801 = vmatprep.subr.bf16.mxu0 0
      %1802 = vmatpush1.bf16.msra.mxu0 %v1756
      %1803 = vmatprep.subr.bf16.mxu0 0
      %1804 = vmatpush1.bf16.msra.mxu0 %v1757
      %1805 = vmatprep.subr.bf16.mxu0 0
      %1806 = vmatpush1.bf16.msra.mxu0 %v1758
      %1807 = vmatprep.mubr.bf16.mxu0 %v1069
      %1808 = vmatmul.mubr.bf16.gmra.mrb[0].mxu0 %v1068
      %v1809 = vpop.f32.mrb[0].mxu0
      %v1810 = vadd.f32 %v1553, %v1809
      %v1811 = vpop.f32.mrb[0].mxu0
      %v1812 = vpop.f32.mrb[0].mxu0
      %v1813 = vadd.f32 %v1556, %v1812
      %v1814 = vpop.f32.mrb[0].mxu0
      %1815 = vmatprep.mubr.bf16.mxu0 %v1071
      %1816 = vmatmul.mubr.bf16.gmra.mrb[0].mxu0 %v1070
      %v1817 = vpop.f32.mrb[0].mxu0
      %v1818 = vadd.f32 %v1561, %v1817
      %v1819 = vpop.f32.mrb[0].mxu0
      %v1820 = vpop.f32.mrb[0].mxu0
      %v1821 = vadd.f32 %v1564, %v1820
      %v1822 = vpop.f32.mrb[0].mxu0
      %1823 = vmatprep.mubr.bf16.mxu0 %v1073
      %1824 = vmatmul.mubr.bf16.gmra.mrb[0].mxu0 %v1072
      %v1825 = vpop.f32.mrb[0].mxu0
      %v1826 = vadd.f32 %v1569, %v1825
      %v1827 = vpop.f32.mrb[0].mxu0
      %v1828 = vpop.f32.mrb[0].mxu0
      %v1829 = vadd.f32 %v1572, %v1828
      %v1830 = vpop.f32.mrb[0].mxu0
      %1831 = vmatprep.mubr.bf16.mxu0 %v1075
      %1832 = vmatmul.mubr.bf16.gmra.mrb[0].mxu0 %v1074
      %v1833 = vpop.f32.mrb[0].mxu0
      %v1834 = vadd.f32 %v1577, %v1833
      %v1835 = vpop.f32.mrb[0].mxu0
      %v1836 = vpop.f32.mrb[0].mxu0
      %v1837 = vadd.f32 %v1580, %v1836
      %v1838 = vpop.f32.mrb[0].mxu0
      %1839 = vmatprep.mubr.bf16.mxu0 %v1077
      %1840 = vmatmul.mubr.bf16.gmra.mrb[0].mxu0 %v1076
      %v1841 = vpop.f32.mrb[0].mxu0
      %v1842 = vadd.f32 %v1585, %v1841
      %v1843 = vpop.f32.mrb[0].mxu0
      %v1844 = vpop.f32.mrb[0].mxu0
      %v1845 = vadd.f32 %v1588, %v1844
      %v1846 = vpop.f32.mrb[0].mxu0
      %1847 = vmatprep.mubr.bf16.mxu0 %v1079
      %1848 = vmatmul.mubr.bf16.gmra.mrb[0].mxu0 %v1078
      %v1849 = vpop.f32.mrb[0].mxu0
      %v1850 = vadd.f32 %v1593, %v1849
      %v1851 = vpop.f32.mrb[0].mxu0
      %v1852 = vpop.f32.mrb[0].mxu0
      %v1853 = vadd.f32 %v1596, %v1852
      %v1854 = vpop.f32.mrb[0].mxu0
      %1855 = vmatprep.mubr.bf16.mxu0 %v1081
      %1856 = vmatmul.mubr.bf16.gmra.mrb[0].mxu0 %v1080
      %v1857 = vpop.f32.mrb[0].mxu0
      %v1858 = vadd.f32 %v1601, %v1857
      %v1859 = vpop.f32.mrb[0].mxu0
      %v1860 = vpop.f32.mrb[0].mxu0
      %v1861 = vadd.f32 %v1604, %v1860
      %v1862 = vpop.f32.mrb[0].mxu0
      %1863 = vmatprep.mubr.bf16.mxu0 %v1083
      %1864 = vmatmul.mubr.bf16.gmra.mrb[0].mxu0 %v1082
      %v1865 = vpop.f32.mrb[0].mxu0
      %v1866 = vadd.f32 %v1609, %v1865
      %v1867 = vpop.f32.mrb[0].mxu0
      %v1868 = vpop.f32.mrb[0].mxu0
      %v1869 = vadd.f32 %v1612, %v1868
      %v1870 = vpop.f32.mrb[0].mxu0
      %1871 = vmatprep.mubr.bf16.mxu0 %v1085
      %1872 = vmatmul.mubr.bf16.gmra.mrb[0].mxu0 %v1084
      %v1873 = vpop.f32.mrb[0].mxu0
      %v1874 = vadd.f32 %v1617, %v1873
      %v1875 = vpop.f32.mrb[0].mxu0
      %v1876 = vpop.f32.mrb[0].mxu0
      %v1877 = vadd.f32 %v1620, %v1876
      %v1878 = vpop.f32.mrb[0].mxu0
      %1879 = vmatprep.mubr.bf16.mxu0 %v1087
      %1880 = vmatmul.mubr.bf16.gmra.mrb[0].mxu0 %v1086
      %v1881 = vpop.f32.mrb[0].mxu0
      %v1882 = vadd.f32 %v1625, %v1881
      %v1883 = vpop.f32.mrb[0].mxu0
      %v1884 = vpop.f32.mrb[0].mxu0
      %v1885 = vadd.f32 %v1628, %v1884
      %v1886 = vpop.f32.mrb[0].mxu0
      %1887 = vmatprep.mubr.bf16.mxu0 %v1089
      %1888 = vmatmul.mubr.bf16.gmra.mrb[0].mxu0 %v1088
      %v1889 = vpop.f32.mrb[0].mxu0
      %v1890 = vadd.f32 %v1633, %v1889
      %v1891 = vpop.f32.mrb[0].mxu0
      %v1892 = vpop.f32.mrb[0].mxu0
      %v1893 = vadd.f32 %v1636, %v1892
      %v1894 = vpop.f32.mrb[0].mxu0
      %1895 = vmatprep.mubr.bf16.mxu0 %v1091
      %1896 = vmatmul.mubr.bf16.gmra.mrb[0].mxu0 %v1090
      %v1897 = vpop.f32.mrb[0].mxu0
      %v1898 = vadd.f32 %v1641, %v1897
      %v1899 = vpop.f32.mrb[0].mxu0
      %v1900 = vpop.f32.mrb[0].mxu0
      %v1901 = vadd.f32 %v1644, %v1900
      %v1902 = vpop.f32.mrb[0].mxu0
      %1903 = vmatprep.mubr.bf16.mxu0 %v1093
      %1904 = vmatmul.mubr.bf16.gmra.mrb[0].mxu0 %v1092
      %v1905 = vpop.f32.mrb[0].mxu0
      %v1906 = vadd.f32 %v1649, %v1905
      %v1907 = vpop.f32.mrb[0].mxu0
      %v1908 = vpop.f32.mrb[0].mxu0
      %v1909 = vadd.f32 %v1652, %v1908
      %v1910 = vpop.f32.mrb[0].mxu0
      %1911 = vmatprep.mubr.bf16.mxu0 %v1095
      %1912 = vmatmul.mubr.bf16.gmra.mrb[0].mxu0 %v1094
      %v1913 = vpop.f32.mrb[0].mxu0
      %v1914 = vadd.f32 %v1657, %v1913
      %v1915 = vpop.f32.mrb[0].mxu0
      %v1916 = vpop.f32.mrb[0].mxu0
      %v1917 = vadd.f32 %v1660, %v1916
      %v1918 = vpop.f32.mrb[0].mxu0
      %1919 = vmatprep.mubr.bf16.mxu0 %v1097
      %1920 = vmatmul.mubr.bf16.gmra.mrb[0].mxu0 %v1096
      %v1921 = vpop.f32.mrb[0].mxu0
      %v1922 = vadd.f32 %v1665, %v1921
      %v1923 = vpop.f32.mrb[0].mxu0
      %v1924 = vpop.f32.mrb[0].mxu0
      %v1925 = vadd.f32 %v1668, %v1924
      %v1926 = vpop.f32.mrb[0].mxu0
      %1927 = vmatprep.mubr.bf16.mxu0 %v1099
      %1928 = vmatmul.mubr.bf16.gmra.mrb[0].mxu0 %v1098
      %v1929 = vpop.f32.mrb[0].mxu0
      %v1930 = vadd.f32 %v1673, %v1929
      %v1931 = vpop.f32.mrb[0].mxu0
      %v1932 = vpop.f32.mrb[0].mxu0
      %v1933 = vadd.f32 %v1676, %v1932
      %v1934 = vpop.f32.mrb[0].mxu0
      %1935 = vdwg.mxu0
      %s1936 = scalar_lea.vmem %s5, 256
      %v1937 = vld [vmem:[%s1936] sm:$0xf]
      %v1938 = vld [vmem:[%s1936 + $0x4] sm:$0xf]
      %v1939 = vld [vmem:[%s1936 + $0x8] sm:$0xf]
      %v1940 = vld [vmem:[%s1936 + $0xc] sm:$0xf]
      %v1941 = vld [vmem:[%s1936 + $0x10] sm:$0xf]
      %v1942 = vld [vmem:[%s1936 + $0x14] sm:$0xf]
      %v1943 = vld [vmem:[%s1936 + $0x18] sm:$0xf]
      %v1944 = vld [vmem:[%s1936 + $0x1c] sm:$0xf]
      %v1945 = vld [vmem:[%s1936 + $0x20] sm:$0xf]
      %v1946 = vld [vmem:[%s1936 + $0x24] sm:$0xf]
      %v1947 = vld [vmem:[%s1936 + $0x28] sm:$0xf]
      %v1948 = vld [vmem:[%s1936 + $0x2c] sm:$0xf]
      %v1949 = vld [vmem:[%s1936 + $0x30] sm:$0xf]
      %v1950 = vld [vmem:[%s1936 + $0x34] sm:$0xf]
      %v1951 = vld [vmem:[%s1936 + $0x38] sm:$0xf]
      %v1952 = vld [vmem:[%s1936 + $0x3c] sm:$0xf]
      %v1953 = vld [vmem:[%s1936 + $0x40] sm:$0xf]
      %v1954 = vld [vmem:[%s1936 + $0x44] sm:$0xf]
      %v1955 = vld [vmem:[%s1936 + $0x48] sm:$0xf]
      %v1956 = vld [vmem:[%s1936 + $0x4c] sm:$0xf]
      %v1957 = vld [vmem:[%s1936 + $0x50] sm:$0xf]
      %v1958 = vld [vmem:[%s1936 + $0x54] sm:$0xf]
      %v1959 = vld [vmem:[%s1936 + $0x58] sm:$0xf]
      %v1960 = vld [vmem:[%s1936 + $0x5c] sm:$0xf]
      %v1961 = vld [vmem:[%s1936 + $0x60] sm:$0xf]
      %v1962 = vld [vmem:[%s1936 + $0x64] sm:$0xf]
      %v1963 = vld [vmem:[%s1936 + $0x68] sm:$0xf]
      %v1964 = vld [vmem:[%s1936 + $0x6c] sm:$0xf]
      %v1965 = vld [vmem:[%s1936 + $0x70] sm:$0xf]
      %v1966 = vld [vmem:[%s1936 + $0x74] sm:$0xf]
      %v1967 = vld [vmem:[%s1936 + $0x78] sm:$0xf]
      %v1968 = vld [vmem:[%s1936 + $0x7c] sm:$0xf]
      %v2001 = vunpack.c.l.b16 %v1937
      %v2002 = vunpack.c.l.b16 %v1938
      %v2003 = vunpack.c.l.b16 %v1939
      %v2004 = vunpack.c.l.b16 %v1940
      %v2005 = vunpack.c.l.b16 %v1941
      %v2006 = vunpack.c.l.b16 %v1942
      %v2007 = vunpack.c.l.b16 %v1943
      %v2008 = vunpack.c.l.b16 %v1944
      %v2009 = vunpack.c.l.b16 %v1945
      %v2010 = vunpack.c.l.b16 %v1946
      %v2011 = vunpack.c.l.b16 %v1947
      %v2012 = vunpack.c.l.b16 %v1948
      %v2013 = vunpack.c.l.b16 %v1949
      %v2014 = vunpack.c.l.b16 %v1950
      %v2015 = vunpack.c.l.b16 %v1951
      %v2016 = vunpack.c.l.b16 %v1952
      %v2017 = vunpack.c.l.b16 %v1953
      %v2018 = vunpack.c.l.b16 %v1954
      %v2019 = vunpack.c.l.b16 %v1955
      %v2020 = vunpack.c.l.b16 %v1956
      %v2021 = vunpack.c.l.b16 %v1957
      %v2022 = vunpack.c.l.b16 %v1958
      %v2023 = vunpack.c.l.b16 %v1959
      %v2024 = vunpack.c.l.b16 %v1960
      %v2025 = vunpack.c.l.b16 %v1961
      %v2026 = vunpack.c.l.b16 %v1962
      %v2027 = vunpack.c.l.b16 %v1963
      %v2028 = vunpack.c.l.b16 %v1964
      %v2029 = vunpack.c.l.b16 %v1965
      %v2030 = vunpack.c.l.b16 %v1966
      %v2031 = vunpack.c.l.b16 %v1967
      %v2032 = vunpack.c.l.b16 %v1968
      %v2033 = vpack.c.b16 %v2002, %v2001
      %v2034 = vpack.c.b16 %v2004, %v2003
      %v2035 = vpack.c.b16 %v2006, %v2005
      %v2036 = vpack.c.b16 %v2008, %v2007
      %v2037 = vpack.c.b16 %v2010, %v2009
      %v2038 = vpack.c.b16 %v2012, %v2011
      %v2039 = vpack.c.b16 %v2014, %v2013
      %v2040 = vpack.c.b16 %v2016, %v2015
      %v2041 = vpack.c.b16 %v2018, %v2017
      %v2042 = vpack.c.b16 %v2020, %v2019
      %v2043 = vpack.c.b16 %v2022, %v2021
      %v2044 = vpack.c.b16 %v2024, %v2023
      %v2045 = vpack.c.b16 %v2026, %v2025
      %v2046 = vpack.c.b16 %v2028, %v2027
      %v2047 = vpack.c.b16 %v2030, %v2029
      %v2048 = vpack.c.b16 %v2032, %v2031
      %2065 = vmatprep.subr.bf16.mxu0 0
      %2066 = vmatpush1.bf16.msra.mxu0 %v2033
      %2067 = vmatprep.subr.bf16.mxu0 0
      %2068 = vmatpush1.bf16.msra.mxu0 %v2034
      %2069 = vmatprep.subr.bf16.mxu0 0
      %2070 = vmatpush1.bf16.msra.mxu0 %v2035
      %2071 = vmatprep.subr.bf16.mxu0 0
      %2072 = vmatpush1.bf16.msra.mxu0 %v2036
      %2073 = vmatprep.subr.bf16.mxu0 0
      %2074 = vmatpush1.bf16.msra.mxu0 %v2037
      %2075 = vmatprep.subr.bf16.mxu0 0
      %2076 = vmatpush1.bf16.msra.mxu0 %v2038
      %2077 = vmatprep.subr.bf16.mxu0 0
      %2078 = vmatpush1.bf16.msra.mxu0 %v2039
      %2079 = vmatprep.subr.bf16.mxu0 0
      %2080 = vmatpush1.bf16.msra.mxu0 %v2040
      %2081 = vmatprep.subr.bf16.mxu0 0
      %2082 = vmatpush1.bf16.msra.mxu0 %v2041
      %2083 = vmatprep.subr.bf16.mxu0 0
      %2084 = vmatpush1.bf16.msra.mxu0 %v2042
      %2085 = vmatprep.subr.bf16.mxu0 0
      %2086 = vmatpush1.bf16.msra.mxu0 %v2043
      %2087 = vmatprep.subr.bf16.mxu0 0
      %2088 = vmatpush1.bf16.msra.mxu0 %v2044
      %2089 = vmatprep.subr.bf16.mxu0 0
      %2090 = vmatpush1.bf16.msra.mxu0 %v2045
      %2091 = vmatprep.subr.bf16.mxu0 0
      %2092 = vmatpush1.bf16.msra.mxu0 %v2046
      %2093 = vmatprep.subr.bf16.mxu0 0
      %2094 = vmatpush1.bf16.msra.mxu0 %v2047
      %2095 = vmatprep.subr.bf16.mxu0 0
      %2096 = vmatpush1.bf16.msra.mxu0 %v2048
      %2097 = vmatprep.mubr.bf16.mxu0 %v1326
      %2098 = vmatmul.mubr.bf16.gmra.mrb[0].mxu0 %v1325
      %v2099 = vpop.f32.mrb[0].mxu0
      %v2100 = vadd.f32 0.0, %v2099
      %v2101 = vpop.f32.mrb[0].mxu0
      %v2102 = vpop.f32.mrb[0].mxu0
      %v2103 = vadd.f32 0.0, %v2102
      %v2104 = vpop.f32.mrb[0].mxu0
      %2105 = vmatprep.mubr.bf16.mxu0 %v1328
      %2106 = vmatmul.mubr.bf16.gmra.mrb[0].mxu0 %v1327
      %v2107 = vpop.f32.mrb[0].mxu0
      %v2108 = vadd.f32 0.0, %v2107
      %v2109 = vpop.f32.mrb[0].mxu0
      %v2110 = vpop.f32.mrb[0].mxu0
      %v2111 = vadd.f32 0.0, %v2110
      %v2112 = vpop.f32.mrb[0].mxu0
      %2113 = vmatprep.mubr.bf16.mxu0 %v1330
      %2114 = vmatmul.mubr.bf16.gmra.mrb[0].mxu0 %v1329
      %v2115 = vpop.f32.mrb[0].mxu0
      %v2116 = vadd.f32 0.0, %v2115
      %v2117 = vpop.f32.mrb[0].mxu0
      %v2118 = vpop.f32.mrb[0].mxu0
      %v2119 = vadd.f32 0.0, %v2118
      %v2120 = vpop.f32.mrb[0].mxu0
      %2121 = vmatprep.mubr.bf16.mxu0 %v1332
      %2122 = vmatmul.mubr.bf16.gmra.mrb[0].mxu0 %v1331
      %v2123 = vpop.f32.mrb[0].mxu0
      %v2124 = vadd.f32 0.0, %v2123
      %v2125 = vpop.f32.mrb[0].mxu0
      %v2126 = vpop.f32.mrb[0].mxu0
      %v2127 = vadd.f32 0.0, %v2126
      %v2128 = vpop.f32.mrb[0].mxu0
      %2129 = vmatprep.mubr.bf16.mxu0 %v1334
      %2130 = vmatmul.mubr.bf16.gmra.mrb[0].mxu0 %v1333
      %v2131 = vpop.f32.mrb[0].mxu0
      %v2132 = vadd.f32 0.0, %v2131
      %v2133 = vpop.f32.mrb[0].mxu0
      %v2134 = vpop.f32.mrb[0].mxu0
      %v2135 = vadd.f32 0.0, %v2134
      %v2136 = vpop.f32.mrb[0].mxu0
      %2137 = vmatprep.mubr.bf16.mxu0 %v1336
      %2138 = vmatmul.mubr.bf16.gmra.mrb[0].mxu0 %v1335
      %v2139 = vpop.f32.mrb[0].mxu0
      %v2140 = vadd.f32 0.0, %v2139
      %v2141 = vpop.f32.mrb[0].mxu0
      %v2142 = vpop.f32.mrb[0].mxu0
      %v2143 = vadd.f32 0.0, %v2142
      %v2144 = vpop.f32.mrb[0].mxu0
      %2145 = vmatprep.mubr.bf16.mxu0 %v1338
      %2146 = vmatmul.mubr.bf16.gmra.mrb[0].mxu0 %v1337
      %v2147 = vpop.f32.mrb[0].mxu0
      %v2148 = vadd.f32 0.0, %v2147
      %v2149 = vpop.f32.mrb[0].mxu0
      %v2150 = vpop.f32.mrb[0].mxu0
      %v2151 = vadd.f32 0.0, %v2150
      %v2152 = vpop.f32.mrb[0].mxu0
      %2153 = vmatprep.mubr.bf16.mxu0 %v1340
      %2154 = vmatmul.mubr.bf16.gmra.mrb[0].mxu0 %v1339
      %v2155 = vpop.f32.mrb[0].mxu0
      %v2156 = vadd.f32 0.0, %v2155
      %v2157 = vpop.f32.mrb[0].mxu0
      %v2158 = vpop.f32.mrb[0].mxu0
      %v2159 = vadd.f32 0.0, %v2158
      %v2160 = vpop.f32.mrb[0].mxu0
      %2161 = vmatprep.mubr.bf16.mxu0 %v1342
      %2162 = vmatmul.mubr.bf16.gmra.mrb[0].mxu0 %v1341
      %v2163 = vpop.f32.mrb[0].mxu0
      %v2164 = vadd.f32 0.0, %v2163
      %v2165 = vpop.f32.mrb[0].mxu0
      %v2166 = vpop.f32.mrb[0].mxu0
      %v2167 = vadd.f32 0.0, %v2166
      %v2168 = vpop.f32.mrb[0].mxu0
      %2169 = vmatprep.mubr.bf16.mxu0 %v1344
      %2170 = vmatmul.mubr.bf16.gmra.mrb[0].mxu0 %v1343
      %v2171 = vpop.f32.mrb[0].mxu0
      %v2172 = vadd.f32 0.0, %v2171
      %v2173 = vpop.f32.mrb[0].mxu0
      %v2174 = vpop.f32.mrb[0].mxu0
      %v2175 = vadd.f32 0.0, %v2174
      %v2176 = vpop.f32.mrb[0].mxu0
      %2177 = vmatprep.mubr.bf16.mxu0 %v1346
      %2178 = vmatmul.mubr.bf16.gmra.mrb[0].mxu0 %v1345
      %v2179 = vpop.f32.mrb[0].mxu0
      %v2180 = vadd.f32 0.0, %v2179
      %v2181 = vpop.f32.mrb[0].mxu0
      %v2182 = vpop.f32.mrb[0].mxu0
      %v2183 = vadd.f32 0.0, %v2182
      %v2184 = vpop.f32.mrb[0].mxu0
      %2185 = vmatprep.mubr.bf16.mxu0 %v1348
      %2186 = vmatmul.mubr.bf16.gmra.mrb[0].mxu0 %v1347
      %v2187 = vpop.f32.mrb[0].mxu0
      %v2188 = vadd.f32 0.0, %v2187
      %v2189 = vpop.f32.mrb[0].mxu0
      %v2190 = vpop.f32.mrb[0].mxu0
      %v2191 = vadd.f32 0.0, %v2190
      %v2192 = vpop.f32.mrb[0].mxu0
      %2193 = vmatprep.mubr.bf16.mxu0 %v1350
      %2194 = vmatmul.mubr.bf16.gmra.mrb[0].mxu0 %v1349
      %v2195 = vpop.f32.mrb[0].mxu0
      %v2196 = vadd.f32 0.0, %v2195
      %v2197 = vpop.f32.mrb[0].mxu0
      %v2198 = vpop.f32.mrb[0].mxu0
      %v2199 = vadd.f32 0.0, %v2198
      %v2200 = vpop.f32.mrb[0].mxu0
      %2201 = vmatprep.mubr.bf16.mxu0 %v1352
      %2202 = vmatmul.mubr.bf16.gmra.mrb[0].mxu0 %v1351
      %v2203 = vpop.f32.mrb[0].mxu0
      %v2204 = vadd.f32 0.0, %v2203
      %v2205 = vpop.f32.mrb[0].mxu0
      %v2206 = vpop.f32.mrb[0].mxu0
      %v2207 = vadd.f32 0.0, %v2206
      %v2208 = vpop.f32.mrb[0].mxu0
      %2209 = vmatprep.mubr.bf16.mxu0 %v1354
      %2210 = vmatmul.mubr.bf16.gmra.mrb[0].mxu0 %v1353
      %v2211 = vpop.f32.mrb[0].mxu0
      %v2212 = vadd.f32 0.0, %v2211
      %v2213 = vpop.f32.mrb[0].mxu0
      %v2214 = vpop.f32.mrb[0].mxu0
      %v2215 = vadd.f32 0.0, %v2214
      %v2216 = vpop.f32.mrb[0].mxu0
      %2217 = vmatprep.mubr.bf16.mxu0 %v1356
      %2218 = vmatmul.mubr.bf16.gmra.mrb[0].mxu0 %v1355
      %v2219 = vpop.f32.mrb[0].mxu0
      %v2220 = vadd.f32 0.0, %v2219
      %v2221 = vpop.f32.mrb[0].mxu0
      %v2222 = vpop.f32.mrb[0].mxu0
      %v2223 = vadd.f32 0.0, %v2222
      %v2224 = vpop.f32.mrb[0].mxu0
      %2225 = vdwg.mxu0
      %v2226 = vadd.f32 %v1810, %v2100
      %v2227 = vadd.f32 %v1813, %v2103
      %v2228 = vadd.f32 %v1818, %v2108
      %v2229 = vadd.f32 %v1821, %v2111
      %v2230 = vadd.f32 %v1826, %v2116
      %v2231 = vadd.f32 %v1829, %v2119
      %v2232 = vadd.f32 %v1834, %v2124
      %v2233 = vadd.f32 %v1837, %v2127
      %v2234 = vadd.f32 %v1842, %v2132
      %v2235 = vadd.f32 %v1845, %v2135
      %v2236 = vadd.f32 %v1850, %v2140
      %v2237 = vadd.f32 %v1853, %v2143
      %v2238 = vadd.f32 %v1858, %v2148
      %v2239 = vadd.f32 %v1861, %v2151
      %v2240 = vadd.f32 %v1866, %v2156
      %v2241 = vadd.f32 %v1869, %v2159
      %v2242 = vadd.f32 %v1874, %v2164
      %v2243 = vadd.f32 %v1877, %v2167
      %v2244 = vadd.f32 %v1882, %v2172
      %v2245 = vadd.f32 %v1885, %v2175
      %v2246 = vadd.f32 %v1890, %v2180
      %v2247 = vadd.f32 %v1893, %v2183
      %v2248 = vadd.f32 %v1898, %v2188
      %v2249 = vadd.f32 %v1901, %v2191
      %v2250 = vadd.f32 %v1906, %v2196
      %v2251 = vadd.f32 %v1909, %v2199
      %v2252 = vadd.f32 %v1914, %v2204
      %v2253 = vadd.f32 %v1917, %v2207
      %v2254 = vadd.f32 %v1922, %v2212
      %v2255 = vadd.f32 %v1925, %v2215
      %v2256 = vadd.f32 %v1930, %v2220
      %v2257 = vadd.f32 %v1933, %v2223
      %2289 = vrot.lane.b32.xlu0 0.0, 8
      %v2290 = vpop.permute.xlu0 %2289
      %2291 = vrot.lane.b32.xlu0 %v2226, 8
      %v2292 = vpop.permute.xlu0 %2291
      %2293 = vrot.lane.b32.xlu0 %v2227, 8
      %v2294 = vpop.permute.xlu0 %2293
      %2295 = vrot.lane.b32.xlu0 %v2228, 8
      %v2296 = vpop.permute.xlu0 %2295
      %2297 = vrot.lane.b32.xlu0 %v2229, 8
      %v2298 = vpop.permute.xlu0 %2297
      %2299 = vrot.lane.b32.xlu0 %v2230, 8
      %v2300 = vpop.permute.xlu0 %2299
      %2301 = vrot.lane.b32.xlu0 %v2231, 8
      %v2302 = vpop.permute.xlu0 %2301
      %2303 = vrot.lane.b32.xlu0 %v2232, 8
      %v2304 = vpop.permute.xlu0 %2303
      %2305 = vrot.lane.b32.xlu0 %v2233, 8
      %v2306 = vpop.permute.xlu0 %2305
      %2307 = vrot.lane.b32.xlu0 %v2234, 8
      %v2308 = vpop.permute.xlu0 %2307
      %2309 = vrot.lane.b32.xlu0 %v2235, 8
      %v2310 = vpop.permute.xlu0 %2309
      %2311 = vrot.lane.b32.xlu0 %v2236, 8
      %v2312 = vpop.permute.xlu0 %2311
      %2313 = vrot.lane.b32.xlu0 %v2237, 8
      %v2314 = vpop.permute.xlu0 %2313
      %2315 = vrot.lane.b32.xlu0 %v2238, 8
      %v2316 = vpop.permute.xlu0 %2315
      %2317 = vrot.lane.b32.xlu0 %v2239, 8
      %v2318 = vpop.permute.xlu0 %2317
      %2319 = vrot.lane.b32.xlu0 %v2240, 8
      %v2320 = vpop.permute.xlu0 %2319
      %2321 = vrot.lane.b32.xlu0 %v2241, 8
      %v2322 = vpop.permute.xlu0 %2321
      %2323 = vrot.lane.b32.xlu0 %v2242, 8
      %v2324 = vpop.permute.xlu0 %2323
      %2325 = vrot.lane.b32.xlu0 %v2243, 8
      %v2326 = vpop.permute.xlu0 %2325
      %2327 = vrot.lane.b32.xlu0 %v2244, 8
      %v2328 = vpop.permute.xlu0 %2327
      %2329 = vrot.lane.b32.xlu0 %v2245, 8
      %v2330 = vpop.permute.xlu0 %2329
      %2331 = vrot.lane.b32.xlu0 %v2246, 8
      %v2332 = vpop.permute.xlu0 %2331
      %2333 = vrot.lane.b32.xlu0 %v2247, 8
      %v2334 = vpop.permute.xlu0 %2333
      %2335 = vrot.lane.b32.xlu0 %v2248, 8
      %v2336 = vpop.permute.xlu0 %2335
      %2337 = vrot.lane.b32.xlu0 %v2249, 8
      %v2338 = vpop.permute.xlu0 %2337
      %2339 = vrot.lane.b32.xlu0 %v2250, 8
      %v2340 = vpop.permute.xlu0 %2339
      %2341 = vrot.lane.b32.xlu0 %v2251, 8
      %v2342 = vpop.permute.xlu0 %2341
      %2343 = vrot.lane.b32.xlu0 %v2252, 8
      %v2344 = vpop.permute.xlu0 %2343
      %2345 = vrot.lane.b32.xlu0 %v2253, 8
      %v2346 = vpop.permute.xlu0 %2345
      %2347 = vrot.lane.b32.xlu0 %v2254, 8
      %v2348 = vpop.permute.xlu0 %2347
      %2349 = vrot.lane.b32.xlu0 %v2255, 8
      %v2350 = vpop.permute.xlu0 %2349
      %v2382 = vadd.f32 %v2226, %v2290
      %v2383 = vadd.f32 %v2227, %v2290
      %v2384 = vadd.f32 %v2228, %v2292
      %v2385 = vadd.f32 %v2229, %v2294
      %v2386 = vadd.f32 %v2230, %v2296
      %v2387 = vadd.f32 %v2231, %v2298
      %v2388 = vadd.f32 %v2232, %v2300
      %v2389 = vadd.f32 %v2233, %v2302
      %v2390 = vadd.f32 %v2234, %v2304
      %v2391 = vadd.f32 %v2235, %v2306
      %v2392 = vadd.f32 %v2236, %v2308
      %v2393 = vadd.f32 %v2237, %v2310
      %v2394 = vadd.f32 %v2238, %v2312
      %v2395 = vadd.f32 %v2239, %v2314
      %v2396 = vadd.f32 %v2240, %v2316
      %v2397 = vadd.f32 %v2241, %v2318
      %v2398 = vadd.f32 %v2242, %v2320
      %v2399 = vadd.f32 %v2243, %v2322
      %v2400 = vadd.f32 %v2244, %v2324
      %v2401 = vadd.f32 %v2245, %v2326
      %v2402 = vadd.f32 %v2246, %v2328
      %v2403 = vadd.f32 %v2247, %v2330
      %v2404 = vadd.f32 %v2248, %v2332
      %v2405 = vadd.f32 %v2249, %v2334
      %v2406 = vadd.f32 %v2250, %v2336
      %v2407 = vadd.f32 %v2251, %v2338
      %v2408 = vadd.f32 %v2252, %v2340
      %v2409 = vadd.f32 %v2253, %v2342
      %v2410 = vadd.f32 %v2254, %v2344
      %v2411 = vadd.f32 %v2255, %v2346
      %v2412 = vadd.f32 %v2256, %v2348
      %v2413 = vadd.f32 %v2257, %v2350
      %2416 = vrot.lane.b32.xlu0 %v2228, 120
      %v2417 = vpop.permute.xlu0 %2416
      %2418 = vrot.lane.b32.xlu0 %v2229, 120
      %v2419 = vpop.permute.xlu0 %2418
      %2420 = vrot.lane.b32.xlu0 %v2230, 120
      %v2421 = vpop.permute.xlu0 %2420
      %2422 = vrot.lane.b32.xlu0 %v2231, 120
      %v2423 = vpop.permute.xlu0 %2422
      %2424 = vrot.lane.b32.xlu0 %v2232, 120
      %v2425 = vpop.permute.xlu0 %2424
      %2426 = vrot.lane.b32.xlu0 %v2233, 120
      %v2427 = vpop.permute.xlu0 %2426
      %2428 = vrot.lane.b32.xlu0 %v2234, 120
      %v2429 = vpop.permute.xlu0 %2428
      %2430 = vrot.lane.b32.xlu0 %v2235, 120
      %v2431 = vpop.permute.xlu0 %2430
      %2432 = vrot.lane.b32.xlu0 %v2236, 120
      %v2433 = vpop.permute.xlu0 %2432
      %2434 = vrot.lane.b32.xlu0 %v2237, 120
      %v2435 = vpop.permute.xlu0 %2434
      %2436 = vrot.lane.b32.xlu0 %v2238, 120
      %v2437 = vpop.permute.xlu0 %2436
      %2438 = vrot.lane.b32.xlu0 %v2239, 120
      %v2439 = vpop.permute.xlu0 %2438
      %2440 = vrot.lane.b32.xlu0 %v2240, 120
      %v2441 = vpop.permute.xlu0 %2440
      %2442 = vrot.lane.b32.xlu0 %v2241, 120
      %v2443 = vpop.permute.xlu0 %2442
      %2444 = vrot.lane.b32.xlu0 %v2242, 120
      %v2445 = vpop.permute.xlu0 %2444
      %2446 = vrot.lane.b32.xlu0 %v2243, 120
      %v2447 = vpop.permute.xlu0 %2446
      %2448 = vrot.lane.b32.xlu0 %v2244, 120
      %v2449 = vpop.permute.xlu0 %2448
      %2450 = vrot.lane.b32.xlu0 %v2245, 120
      %v2451 = vpop.permute.xlu0 %2450
      %2452 = vrot.lane.b32.xlu0 %v2246, 120
      %v2453 = vpop.permute.xlu0 %2452
      %2454 = vrot.lane.b32.xlu0 %v2247, 120
      %v2455 = vpop.permute.xlu0 %2454
      %2456 = vrot.lane.b32.xlu0 %v2248, 120
      %v2457 = vpop.permute.xlu0 %2456
      %2458 = vrot.lane.b32.xlu0 %v2249, 120
      %v2459 = vpop.permute.xlu0 %2458
      %2460 = vrot.lane.b32.xlu0 %v2250, 120
      %v2461 = vpop.permute.xlu0 %2460
      %2462 = vrot.lane.b32.xlu0 %v2251, 120
      %v2463 = vpop.permute.xlu0 %2462
      %2464 = vrot.lane.b32.xlu0 %v2252, 120
      %v2465 = vpop.permute.xlu0 %2464
      %2466 = vrot.lane.b32.xlu0 %v2253, 120
      %v2467 = vpop.permute.xlu0 %2466
      %2468 = vrot.lane.b32.xlu0 %v2254, 120
      %v2469 = vpop.permute.xlu0 %2468
      %2470 = vrot.lane.b32.xlu0 %v2255, 120
      %v2471 = vpop.permute.xlu0 %2470
      %2472 = vrot.lane.b32.xlu0 %v2256, 120
      %v2473 = vpop.permute.xlu0 %2472
      %2474 = vrot.lane.b32.xlu0 %v2257, 120
      %v2475 = vpop.permute.xlu0 %2474
      %2476 = vrot.lane.b32.xlu0 0.0, 120
      %v2477 = vpop.permute.xlu0 %2476
      %v2509 = vadd.f32 %v2382, %v2417
      %v2510 = vadd.f32 %v2383, %v2419
      %v2511 = vadd.f32 %v2384, %v2421
      %v2512 = vadd.f32 %v2385, %v2423
      %v2513 = vadd.f32 %v2386, %v2425
      %v2514 = vadd.f32 %v2387, %v2427
      %v2515 = vadd.f32 %v2388, %v2429
      %v2516 = vadd.f32 %v2389, %v2431
      %v2517 = vadd.f32 %v2390, %v2433
      %v2518 = vadd.f32 %v2391, %v2435
      %v2519 = vadd.f32 %v2392, %v2437
      %v2520 = vadd.f32 %v2393, %v2439
      %v2521 = vadd.f32 %v2394, %v2441
      %v2522 = vadd.f32 %v2395, %v2443
      %v2523 = vadd.f32 %v2396, %v2445
      %v2524 = vadd.f32 %v2397, %v2447
      %v2525 = vadd.f32 %v2398, %v2449
      %v2526 = vadd.f32 %v2399, %v2451
      %v2527 = vadd.f32 %v2400, %v2453
      %v2528 = vadd.f32 %v2401, %v2455
      %v2529 = vadd.f32 %v2402, %v2457
      %v2530 = vadd.f32 %v2403, %v2459
      %v2531 = vadd.f32 %v2404, %v2461
      %v2532 = vadd.f32 %v2405, %v2463
      %v2533 = vadd.f32 %v2406, %v2465
      %v2534 = vadd.f32 %v2407, %v2467
      %v2535 = vadd.f32 %v2408, %v2469
      %v2536 = vadd.f32 %v2409, %v2471
      %v2537 = vadd.f32 %v2410, %v2473
      %v2538 = vadd.f32 %v2411, %v2475
      %v2539 = vadd.f32 %v2412, %v2477
      %v2540 = vadd.f32 %v2413, %v2477
      %2573 = vrot.lane.b32.xlu0 %v2509, 120
      %v2574 = vpop.permute.xlu0 %2573
      %2575 = vrot.lane.b32.xlu0 %v2510, 120
      %v2576 = vpop.permute.xlu0 %2575
      %2577 = vrot.lane.b32.xlu0 %v2511, 120
      %v2578 = vpop.permute.xlu0 %2577
      %2579 = vrot.lane.b32.xlu0 %v2512, 120
      %v2580 = vpop.permute.xlu0 %2579
      %2581 = vrot.lane.b32.xlu0 %v2513, 120
      %v2582 = vpop.permute.xlu0 %2581
      %2583 = vrot.lane.b32.xlu0 %v2514, 120
      %v2584 = vpop.permute.xlu0 %2583
      %2585 = vrot.lane.b32.xlu0 %v2515, 120
      %v2586 = vpop.permute.xlu0 %2585
      %2587 = vrot.lane.b32.xlu0 %v2516, 120
      %v2588 = vpop.permute.xlu0 %2587
      %2589 = vrot.lane.b32.xlu0 %v2517, 120
      %v2590 = vpop.permute.xlu0 %2589
      %2591 = vrot.lane.b32.xlu0 %v2518, 120
      %v2592 = vpop.permute.xlu0 %2591
      %2593 = vrot.lane.b32.xlu0 %v2519, 120
      %v2594 = vpop.permute.xlu0 %2593
      %2595 = vrot.lane.b32.xlu0 %v2520, 120
      %v2596 = vpop.permute.xlu0 %2595
      %2597 = vrot.lane.b32.xlu0 %v2521, 120
      %v2598 = vpop.permute.xlu0 %2597
      %2599 = vrot.lane.b32.xlu0 %v2522, 120
      %v2600 = vpop.permute.xlu0 %2599
      %2601 = vrot.lane.b32.xlu0 %v2523, 120
      %v2602 = vpop.permute.xlu0 %2601
      %2603 = vrot.lane.b32.xlu0 %v2524, 120
      %v2604 = vpop.permute.xlu0 %2603
      %2605 = vrot.lane.b32.xlu0 %v2525, 120
      %v2606 = vpop.permute.xlu0 %2605
      %2607 = vrot.lane.b32.xlu0 %v2526, 120
      %v2608 = vpop.permute.xlu0 %2607
      %2609 = vrot.lane.b32.xlu0 %v2527, 120
      %v2610 = vpop.permute.xlu0 %2609
      %2611 = vrot.lane.b32.xlu0 %v2528, 120
      %v2612 = vpop.permute.xlu0 %2611
      %2613 = vrot.lane.b32.xlu0 %v2529, 120
      %v2614 = vpop.permute.xlu0 %2613
      %2615 = vrot.lane.b32.xlu0 %v2530, 120
      %v2616 = vpop.permute.xlu0 %2615
      %2617 = vrot.lane.b32.xlu0 %v2531, 120
      %v2618 = vpop.permute.xlu0 %2617
      %2619 = vrot.lane.b32.xlu0 %v2532, 120
      %v2620 = vpop.permute.xlu0 %2619
      %2621 = vrot.lane.b32.xlu0 %v2533, 120
      %v2622 = vpop.permute.xlu0 %2621
      %2623 = vrot.lane.b32.xlu0 %v2534, 120
      %v2624 = vpop.permute.xlu0 %2623
      %2625 = vrot.lane.b32.xlu0 %v2535, 120
      %v2626 = vpop.permute.xlu0 %2625
      %2627 = vrot.lane.b32.xlu0 %v2536, 120
      %v2628 = vpop.permute.xlu0 %2627
      %2629 = vrot.lane.b32.xlu0 %v2537, 120
      %v2630 = vpop.permute.xlu0 %2629
      %2631 = vrot.lane.b32.xlu0 %v2538, 120
      %v2632 = vpop.permute.xlu0 %2631
      %2633 = vrot.lane.b32.xlu0 %v2539, 120
      %v2634 = vpop.permute.xlu0 %2633
      %2635 = vrot.lane.b32.xlu0 %v2540, 120
      %v2636 = vpop.permute.xlu0 %2635
      %vm2669 = vcmask 64512
      %2670 = vst.msk [vmem:[%s251] sm:$0xff] %vm2669, %v2574
      %2671 = vst.msk [vmem:[%s251 + $0x8] sm:$0xff] %vm2669, %v2576
      %2672 = vst.msk [vmem:[%s251 + $0x10] sm:$0xff] %vm2669, %v2578
      %2673 = vst.msk [vmem:[%s251 + $0x18] sm:$0xff] %vm2669, %v2580
      %2674 = vst.msk [vmem:[%s251 + $0x20] sm:$0xff] %vm2669, %v2582
      %2675 = vst.msk [vmem:[%s251 + $0x28] sm:$0xff] %vm2669, %v2584
      %2676 = vst.msk [vmem:[%s251 + $0x30] sm:$0xff] %vm2669, %v2586
      %2677 = vst.msk [vmem:[%s251 + $0x38] sm:$0xff] %vm2669, %v2588
      %2678 = vst.msk [vmem:[%s251 + $0x40] sm:$0xff] %vm2669, %v2590
      %2679 = vst.msk [vmem:[%s251 + $0x48] sm:$0xff] %vm2669, %v2592
      %2680 = vst.msk [vmem:[%s251 + $0x50] sm:$0xff] %vm2669, %v2594
      %2681 = vst.msk [vmem:[%s251 + $0x58] sm:$0xff] %vm2669, %v2596
      %2682 = vst.msk [vmem:[%s251 + $0x60] sm:$0xff] %vm2669, %v2598
      %2683 = vst.msk [vmem:[%s251 + $0x68] sm:$0xff] %vm2669, %v2600
      %2684 = vst.msk [vmem:[%s251 + $0x70] sm:$0xff] %vm2669, %v2602
      %2685 = vst.msk [vmem:[%s251 + $0x78] sm:$0xff] %vm2669, %v2604
      %2686 = vst.msk [vmem:[%s251 + $0x80] sm:$0xff] %vm2669, %v2606
      %2687 = vst.msk [vmem:[%s251 + $0x88] sm:$0xff] %vm2669, %v2608
      %2688 = vst.msk [vmem:[%s251 + $0x90] sm:$0xff] %vm2669, %v2610
      %2689 = vst.msk [vmem:[%s251 + $0x98] sm:$0xff] %vm2669, %v2612
      %2690 = vst.msk [vmem:[%s251 + $0xa0] sm:$0xff] %vm2669, %v2614
      %2691 = vst.msk [vmem:[%s251 + $0xa8] sm:$0xff] %vm2669, %v2616
      %2692 = vst.msk [vmem:[%s251 + $0xb0] sm:$0xff] %vm2669, %v2618
      %2693 = vst.msk [vmem:[%s251 + $0xb8] sm:$0xff] %vm2669, %v2620
      %2694 = vst.msk [vmem:[%s251 + $0xc0] sm:$0xff] %vm2669, %v2622
      %2695 = vst.msk [vmem:[%s251 + $0xc8] sm:$0xff] %vm2669, %v2624
      %2696 = vst.msk [vmem:[%s251 + $0xd0] sm:$0xff] %vm2669, %v2626
      %2697 = vst.msk [vmem:[%s251 + $0xd8] sm:$0xff] %vm2669, %v2628
      %2698 = vst.msk [vmem:[%s251 + $0xe0] sm:$0xff] %vm2669, %v2630
      %2699 = vst.msk [vmem:[%s251 + $0xe8] sm:$0xff] %vm2669, %v2632
      %2700 = vst.msk [vmem:[%s251 + $0xf0] sm:$0xff] %vm2669, %v2634
      %2701 = vst.msk [vmem:[%s251 + $0xf8] sm:$0xff] %vm2669, %v2636
      %p2702 = scmp.lt.s32.totalorder %s17, 1
      %s2703 = scalar_select %p2702, %s17, 1
      %s2704 = smul.addr %s2703, 32
      %s2705 = smul.addr %s2704, 8
      %s2706 = scalar_lea.vmem %s6, %s2705
      // Predicated region
      $region45: #{conv_block_forward.1} parent=43 // pred_check
        %p2707 = pneg %p166
      $region46: #{conv_block_forward.1} parent=43 // pred_check_branch
        %2709 = sbr.rel (%p2707) target = $region48
      $region47: #{conv_block_forward.1} parent=43 // pred_region
        _
      $region48: #{conv_block_forward.1} parent=43 // pred_fallthru
        _
    $region44: #{conv_block_forward.1} parent=5 // pred_fallthru
      _
    %p2710 = scmp.le.s32.totalorder 2, %s12
    // Predicated region
    $region49: #{conv_block_forward.1} parent=5 // pred_check
      %p2711 = pneg %p2710
    $region50: #{conv_block_forward.1} parent=5 // pred_check_branch
      %2713 = sbr.rel (%p2711) target = $region52
    $region51: #{conv_block_forward.1} parent=5 // pred_region
      %s2714 = ssub.s32 %s12, 2
      // Predicated region
      $region53: #{conv_block_forward.1} parent=51 // pred_check
        %p2715 = pneg %p172
      $region54: #{conv_block_forward.1} parent=51 // pred_check_branch
        %2717 = sbr.rel (%p2715) target = $region56
      $region55: #{conv_block_forward.1} parent=51 // pred_region
        %p2718 = scmp.lt.s32.totalorder %s18, 1
        %s2719 = scalar_select %p2718, %s18, 1
        %s2720 = smul.addr %s2719, 32
        %s2721 = smul.addr %s2720, 8
        %s2722 = scalar_lea.vmem %s6, %s2721
      $region56: #{conv_block_forward.1} parent=51 // pred_fallthru
        _
    $region52: #{conv_block_forward.1} parent=5 // pred_fallthru
      _
  $region6: #{conv_block_forward.1} parent=0 // loop_footer
    %s16 = sadd.s32 1, %s12
  $region7: #{conv_block_forward.1} parent=0 // loop_footer_branch
    %11 = sbr.rel target = $region3
  $region8: #{conv_block_forward.1} parent=0 // loop_exit
    _

</llo_original>
